<compile_context>
chip_gen: v7x
topology: tpu7x:2x2x1
jax: 0.10.0
libtpu: 0.0.40
codegen_flags: <defaults>
</compile_context>

<pallas_src>
import functools

import jax
import jax.numpy as jnp
from jax.experimental import pallas as pl
from jax.experimental.pallas import tpu as pltpu

_MXU_PREC = jax.lax.Precision.HIGHEST   # true-f32 matmul passes (kernel == reference math)


def _round_up(x, m):
    return (x + m - 1) // m * m


def _relu6(x):
    return jnp.clip(x, 0.0, 6.0)


def mlp_kernel(xt_ref, yt_ref, w1x_ref, w1y_ref, b1_ref, w2_ref, b2_ref,
               w3_ref, b3_ref, o_ref):
    """One batch tile, batch on the lane axis.

    xt_ref: (dx, TB)   yt_ref: (dy, TB)        -- streamed activation tiles
    w1x:    (H, dx)    w1y:    (H, dy)   b1: (H, 1)
    w2:     (H, H)     b2:     (H, 1)
    w3:     (H, 1)     b3:     (1, 1) in SMEM
    o_ref:  (1, TB)                             -- lane-dense output slab
    """
    # Layer 1: cat(X, Y) @ W1^T  ==  W1x @ X^T + W1y @ Y^T   (transposed, no concat)
    h1 = (jnp.dot(w1x_ref[...], xt_ref[...],
                  preferred_element_type=jnp.float32, precision=_MXU_PREC)
          + jnp.dot(w1y_ref[...], yt_ref[...],
                    preferred_element_type=jnp.float32, precision=_MXU_PREC)
          + b1_ref[...])                        # (H, TB) + (H, 1) lane-broadcast
    h1 = _relu6(h1)

    # Layer 2
    h2 = jnp.dot(w2_ref[...], h1,
                 preferred_element_type=jnp.float32, precision=_MXU_PREC) + b2_ref[...]
    h2 = _relu6(h2)                             # (H, TB)

    # Layer 3 (out_features == 1): VPU multiply + sublane reduce -> lane-dense (1, TB).
    out = jnp.sum(h2 * w3_ref[...], axis=0, keepdims=True) + b3_ref[0, 0]
    o_ref[...] = out.astype(o_ref.dtype)


def init_params(key, dx, dy, hidden_size):
    """Torch nn.Linear default init (U(-1/sqrt(fan_in), +1/sqrt(fan_in))), stored in
    torch's native (out_features, in_features) orientation, all float32.
    W1 is pre-split into its X / Y column blocks; W3 is stored as an (H, 1) column."""
    input_size = dx + dy

    def linear(k, fan_in, fan_out):
        kw, kb = jax.random.split(k)
        bound = 1.0 / jnp.sqrt(jnp.float32(fan_in))
        w = jax.random.uniform(kw, (fan_out, fan_in), jnp.float32, -bound, bound)
        b = jax.random.uniform(kb, (fan_out, 1), jnp.float32, -bound, bound)
        return w, b

    k1, k2, k3 = jax.random.split(key, 3)
    w1, b1 = linear(k1, input_size, hidden_size)   # (H, dx+dy), (H, 1)
    w2, b2 = linear(k2, hidden_size, hidden_size)  # (H, H),     (H, 1)
    w3, b3 = linear(k3, hidden_size, 1)            # (1, H),     (1, 1)

    return (
        w1[:, :dx],   # (H, dx)  f32
        w1[:, dx:],   # (H, dy)  f32
        b1,           # (H, 1)   f32
        w2,           # (H, H)   f32
        b2,           # (H, 1)   f32
        w3.T,         # (H, 1)   f32 column (final layer on VPU/XLU)
        b3,           # (1, 1)   f32 scalar (lives in SMEM)
    )


@functools.partial(jax.jit, static_argnames=("block_rows",))
def mlp_forward(X, Y, params, *, block_rows=4096):
    w1x, w1y, b1, w2, b2, w3, b3 = params
    B, dx = X.shape
    dy = Y.shape[1]

    # Batch tile on the lane axis: multiple of 128, large enough to amortize the
    # per-step pipeline overhead, but leaving >=2 tiles when the batch can be split
    # (so v7x's two TensorCores both get work via the "parallel" grid axis).
    tb_cap = _round_up(max(block_rows, 128), 128)
    TB = min(tb_cap, _round_up(B, 128))
    if B > 256 and _round_up(B, TB) // TB < 2:
        TB = _round_up(-(-B // 2), 128)
    Bp = _round_up(B, TB)

    # Layout plumbing: put batch on lanes. transpose + pad fuse into one XLA copy over
    # the tiny feature axis; padded columns are junk-but-finite and sliced off below.
    Xt = jnp.pad(X.T, ((0, 0), (0, Bp - B)))     # (dx, Bp)
    Yt = jnp.pad(Y.T, ((0, 0), (0, Bp - B)))     # (dy, Bp)

    def stream(d):     # activation tile: new lane window each grid step
        return pl.BlockSpec((d, TB), lambda i: (0, i))

    def resident(a):   # same block every step -> stays VMEM-resident
        return pl.BlockSpec(a.shape, lambda i: (0, 0))

    out = pl.pallas_call(
        mlp_kernel,
        out_shape=jax.ShapeDtypeStruct((1, Bp), jnp.float32),
        grid_spec=pltpu.PrefetchScalarGridSpec(
            num_scalar_prefetch=0,
            grid=(Bp // TB,),
            in_specs=[
                stream(dx), stream(dy),
                resident(w1x), resident(w1y), resident(b1),
                resident(w2), resident(b2), resident(w3),
                pl.BlockSpec(memory_space=pltpu.MemorySpace.SMEM),   # b3 scalar
            ],
            out_specs=pl.BlockSpec((1, TB), lambda i: (0, i)),
        ),
        compiler_params=pltpu.CompilerParams(
            dimension_semantics=("parallel",),   # batch tiles are independent
            # Per-step footprint (double-buffered activations + intermediates) is only
            # ~0.6 KB * TB, comfortably inside 32 MiB on v5e/v6e/v7x.
            vmem_limit_bytes=32 * 1024 * 1024,
        ),
    )(Xt, Yt, w1x, w1y, b1, w2, b2, w3, b3)

    return out[0, :B].reshape(B, 1)


def mlp_reference(X, Y, params):
    """Pure-JAX reference with the torch module's math (f32 throughout)."""
    w1x, w1y, b1, w2, b2, w3, b3 = params
    Z = jnp.concatenate([X, Y], axis=1)
    W1 = jnp.concatenate([w1x, w1y], axis=1)          # (H, dx+dy), torch orientation
    h1 = jnp.clip(jnp.dot(Z, W1.T, precision=_MXU_PREC) + b1.T, 0.0, 6.0)
    h2 = jnp.clip(jnp.dot(h1, w2.T, precision=_MXU_PREC) + b2.T, 0.0, 6.0)
    return jnp.dot(h2, w3, precision=_MXU_PREC) + b3.T   # (B, 1); w3 is (H, 1)


if __name__ == "__main__":
    key = jax.random.PRNGKey(0)
    kx, ky, kp = jax.random.split(key, 3)

    batch = 8
    dx, dy = 4, 4          # torch input_size = dx + dy = 8
    hidden = 32            # torch default is 100; kernel keeps any H VMEM-resident

    X = jax.random.normal(kx, (batch, dx), jnp.float32)
    Y = jax.random.normal(ky, (batch, dy), jnp.float32)
    params = init_params(kp, dx, dy, hidden)

    out = jax.block_until_ready(mlp_forward(X, Y, params))
    ref = mlp_reference(X, Y, params)

    assert out.shape == (batch, 1), out.shape
    max_err = float(jnp.max(jnp.abs(out - ref)))
    assert jnp.allclose(out, ref, atol=1e-3, rtol=1e-3), max_err

    print("KERNEL_OK")
</pallas_src>

<mosaic_0001>
module attributes {stable_mosaic.version = 11 : i64} {
  func.func @mlp_kernel(%arg0: i32, %arg1: memref<4x128xf32, #tpu.memory_space<vmem>>, %arg2: memref<4x128xf32, #tpu.memory_space<vmem>>, %arg3: memref<32x4xf32, #tpu.memory_space<vmem>>, %arg4: memref<32x4xf32, #tpu.memory_space<vmem>>, %arg5: memref<32x1xf32, #tpu.memory_space<vmem>>, %arg6: memref<32x32xf32, #tpu.memory_space<vmem>>, %arg7: memref<32x1xf32, #tpu.memory_space<vmem>>, %arg8: memref<32x1xf32, #tpu.memory_space<vmem>>, %arg9: memref<1x1xf32, #tpu.memory_space<smem>>, %arg10: memref<1x128xf32, #tpu.memory_space<vmem>>) attributes {dimension_semantics = [#tpu.dimension_semantics<parallel>], iteration_bounds = array<i64: 1>, scalar_prefetch = 0 : i64, scratch_operands = 0 : i64, tpu.core_type = #tpu.core_type<tc>, window_params = [{transform_indices = @transform_0, window_bounds = array<i64: 4, 128>}, {transform_indices = @transform_1, window_bounds = array<i64: 4, 128>}, {pipeline_mode = #tpu.pipeline_mode<synchronous>, transform_indices = @transform_2, window_bounds = array<i64: 32, 4>}, {pipeline_mode = #tpu.pipeline_mode<synchronous>, transform_indices = @transform_3, window_bounds = array<i64: 32, 4>}, {pipeline_mode = #tpu.pipeline_mode<synchronous>, transform_indices = @transform_4, window_bounds = array<i64: 32, 1>}, {pipeline_mode = #tpu.pipeline_mode<synchronous>, transform_indices = @transform_5, window_bounds = array<i64: 32, 32>}, {pipeline_mode = #tpu.pipeline_mode<synchronous>, transform_indices = @transform_6, window_bounds = array<i64: 32, 1>}, {pipeline_mode = #tpu.pipeline_mode<synchronous>, transform_indices = @transform_7, window_bounds = array<i64: 32, 1>}, {transform_indices = @transform_8, window_bounds = array<i64: 1, 1>}, {transform_indices = @transform_9, window_bounds = array<i64: 1, 128>}]} {
    %c0 = arith.constant 0 : index
    %c0_0 = arith.constant 0 : index
    %0 = vector.load %arg3[%c0, %c0_0] : memref<32x4xf32, #tpu.memory_space<vmem>>, vector<32x4xf32>
    %c0_1 = arith.constant 0 : index
    %c0_2 = arith.constant 0 : index
    %1 = vector.load %arg1[%c0_1, %c0_2] : memref<4x128xf32, #tpu.memory_space<vmem>>, vector<4x128xf32>
    %cst = arith.constant dense<0.000000e+00> : vector<32x128xf32>
    %2 = tpu.matmul %0, %1, %cst {dimension_numbers = #tpu.dot_dimension_numbers<[1], [0], [0], [1], [0, 0, 1, 1], [], []>, precision = #tpu.contract_precision<fp32>} : vector<32x4xf32>, vector<4x128xf32>, vector<32x128xf32> -> vector<32x128xf32>
    %c0_3 = arith.constant 0 : index
    %c0_4 = arith.constant 0 : index
    %3 = vector.load %arg4[%c0_3, %c0_4] : memref<32x4xf32, #tpu.memory_space<vmem>>, vector<32x4xf32>
    %c0_5 = arith.constant 0 : index
    %c0_6 = arith.constant 0 : index
    %4 = vector.load %arg2[%c0_5, %c0_6] : memref<4x128xf32, #tpu.memory_space<vmem>>, vector<4x128xf32>
    %cst_7 = arith.constant dense<0.000000e+00> : vector<32x128xf32>
    %5 = tpu.matmul %3, %4, %cst_7 {dimension_numbers = #tpu.dot_dimension_numbers<[1], [0], [0], [1], [0, 0, 1, 1], [], []>, precision = #tpu.contract_precision<fp32>} : vector<32x4xf32>, vector<4x128xf32>, vector<32x128xf32> -> vector<32x128xf32>
    %6 = arith.addf %2, %5 : vector<32x128xf32>
    %c0_8 = arith.constant 0 : index
    %c0_9 = arith.constant 0 : index
    %7 = vector.load %arg5[%c0_8, %c0_9] : memref<32x1xf32, #tpu.memory_space<vmem>>, vector<32x1xf32>
    %8 = vector.broadcast %7 : vector<32x1xf32> to vector<32x128xf32>
    %9 = arith.addf %6, %8 : vector<32x128xf32>
    %cst_10 = arith.constant 0.000000e+00 : f32
    %cst_11 = arith.constant 6.000000e+00 : f32
    %10 = vector.broadcast %cst_10 : f32 to vector<32x128xf32>
    %11 = arith.maximumf %10, %9 : vector<32x128xf32>
    %12 = vector.broadcast %cst_11 : f32 to vector<32x128xf32>
    %13 = arith.minimumf %12, %11 : vector<32x128xf32>
    %c0_12 = arith.constant 0 : index
    %c0_13 = arith.constant 0 : index
    %14 = vector.load %arg6[%c0_12, %c0_13] : memref<32x32xf32, #tpu.memory_space<vmem>>, vector<32x32xf32>
    %cst_14 = arith.constant dense<0.000000e+00> : vector<32x128xf32>
    %15 = tpu.matmul %14, %13, %cst_14 {dimension_numbers = #tpu.dot_dimension_numbers<[1], [0], [0], [1], [0, 0, 1, 1], [], []>, precision = #tpu.contract_precision<fp32>} : vector<32x32xf32>, vector<32x128xf32>, vector<32x128xf32> -> vector<32x128xf32>
    %c0_15 = arith.constant 0 : index
    %c0_16 = arith.constant 0 : index
    %16 = vector.load %arg7[%c0_15, %c0_16] : memref<32x1xf32, #tpu.memory_space<vmem>>, vector<32x1xf32>
    %17 = vector.broadcast %16 : vector<32x1xf32> to vector<32x128xf32>
    %18 = arith.addf %15, %17 : vector<32x128xf32>
    %cst_17 = arith.constant 0.000000e+00 : f32
    %cst_18 = arith.constant 6.000000e+00 : f32
    %19 = vector.broadcast %cst_17 : f32 to vector<32x128xf32>
    %20 = arith.maximumf %19, %18 : vector<32x128xf32>
    %21 = vector.broadcast %cst_18 : f32 to vector<32x128xf32>
    %22 = arith.minimumf %21, %20 : vector<32x128xf32>
    %c0_19 = arith.constant 0 : index
    %c0_20 = arith.constant 0 : index
    %23 = vector.load %arg8[%c0_19, %c0_20] : memref<32x1xf32, #tpu.memory_space<vmem>>, vector<32x1xf32>
    %24 = vector.broadcast %23 : vector<32x1xf32> to vector<32x128xf32>
    %25 = arith.mulf %22, %24 : vector<32x128xf32>
    %cst_21 = arith.constant dense<0.000000e+00> : vector<128xf32>
    %26 = vector.multi_reduction <add>, %25, %cst_21 [0] : vector<32x128xf32> to vector<128xf32>
    %27 = vector.shape_cast %26 : vector<128xf32> to vector<1x128xf32>
    %c0_22 = arith.constant 0 : index
    %c0_23 = arith.constant 0 : index
    %28 = memref.load %arg9[%c0_22, %c0_23] : memref<1x1xf32, #tpu.memory_space<smem>>
    %29 = vector.broadcast %28 : f32 to vector<1x128xf32>
    %30 = arith.addf %27, %29 : vector<1x128xf32>
    %c0_24 = arith.constant 0 : index
    %c0_25 = arith.constant 0 : index
    %31 = vector.load %arg10[%c0_24, %c0_25] : memref<1x128xf32, #tpu.memory_space<vmem>>, vector<1x128xf32>
    tpu.vector_store %arg10[%c0_24, %c0_25], %30 {strides = array<i32>} : memref<1x128xf32, #tpu.memory_space<vmem>>, vector<1x128xf32>,
    return
  }
  func.func @transform_0(%arg0: i32) -> (i32, i32) {
    %c0_i32 = arith.constant 0 : i32
    %c0_i32_0 = arith.constant 0 : i32
    return %c0_i32, %arg0 : i32, i32
  }
  func.func @transform_1(%arg0: i32) -> (i32, i32) {
    %c0_i32 = arith.constant 0 : i32
    %c0_i32_0 = arith.constant 0 : i32
    return %c0_i32, %arg0 : i32, i32
  }
  func.func @transform_2(%arg0: i32) -> (i32, i32) {
    %c0_i32 = arith.constant 0 : i32
    %c0_i32_0 = arith.constant 0 : i32
    %c0_i32_1 = arith.constant 0 : i32
    return %c0_i32, %c0_i32_0 : i32, i32
  }
  func.func @transform_3(%arg0: i32) -> (i32, i32) {
    %c0_i32 = arith.constant 0 : i32
    %c0_i32_0 = arith.constant 0 : i32
    %c0_i32_1 = arith.constant 0 : i32
    return %c0_i32, %c0_i32_0 : i32, i32
  }
  func.func @transform_4(%arg0: i32) -> (i32, i32) {
    %c0_i32 = arith.constant 0 : i32
    %c0_i32_0 = arith.constant 0 : i32
    %c0_i32_1 = arith.constant 0 : i32
    return %c0_i32, %c0_i32_0 : i32, i32
  }
  func.func @transform_5(%arg0: i32) -> (i32, i32) {
    %c0_i32 = arith.constant 0 : i32
    %c0_i32_0 = arith.constant 0 : i32
    %c0_i32_1 = arith.constant 0 : i32
    return %c0_i32, %c0_i32_0 : i32, i32
  }
  func.func @transform_6(%arg0: i32) -> (i32, i32) {
    %c0_i32 = arith.constant 0 : i32
    %c0_i32_0 = arith.constant 0 : i32
    %c0_i32_1 = arith.constant 0 : i32
    return %c0_i32, %c0_i32_0 : i32, i32
  }
  func.func @transform_7(%arg0: i32) -> (i32, i32) {
    %c0_i32 = arith.constant 0 : i32
    %c0_i32_0 = arith.constant 0 : i32
    %c0_i32_1 = arith.constant 0 : i32
    return %c0_i32, %c0_i32_0 : i32, i32
  }
  func.func @transform_8(%arg0: i32) -> (i32, i32) {
    %c0_i32 = arith.constant 0 : i32
    %c0_i32_0 = arith.constant 0 : i32
    %c0_i32_1 = arith.constant 0 : i32
    return %c0_i32, %c0_i32_0 : i32, i32
  }
  func.func @transform_9(%arg0: i32) -> (i32, i32) {
    %c0_i32 = arith.constant 0 : i32
    %c0_i32_0 = arith.constant 0 : i32
    return %c0_i32, %arg0 : i32, i32
  }
}

</mosaic_0001>

<llo_original>
// kernel: mlp_forward.1
$region0: #{mlp_forward.1}
  #allocation0 [shape = 'u32[]', space=smem, size = 0x4, offset = 0x4, fixed_abs, tag = 'smem constant byte address 0x4 - core index']
  #allocation1 [shape = 'u32[144,128]{1,0:T(1,128)}', space=vmem, size = 0x12000, scoped, tag = 'internal scratch']
  #allocation2 [shape = 'f32[1,1]{1,0:T(1,128)S(6)}', space=smem, size = 0x200, scoped, tag = 'scoped memory for mlp_forward.1']
  %s0 = inlined_call_operand.vmem [shape: f32[4,128], index: 0, kind: input, shape index: {}]
  %s1 = inlined_call_operand.vmem [shape: f32[4,128], index: 1, kind: input, shape index: {}]
  %s2 = inlined_call_operand.vmem [shape: f32[32,4], index: 2, kind: input, shape index: {}]
  %s3 = inlined_call_operand.vmem [shape: f32[32,4], index: 3, kind: input, shape index: {}]
  %s4 = inlined_call_operand.vmem [shape: f32[32,1], index: 4, kind: input, shape index: {}]
  %s5 = inlined_call_operand.vmem [shape: f32[32,32], index: 5, kind: input, shape index: {}]
  %s6 = inlined_call_operand.vmem [shape: f32[32,1], index: 6, kind: input, shape index: {}]
  %s7 = inlined_call_operand.vmem [shape: f32[32,1], index: 7, kind: input, shape index: {}]
  %s8 = inlined_call_operand.<no memory space> [shape: f32[1,1], index: 8, kind: input, shape index: {}]
  %s9 = inlined_call_operand.vmem [shape: f32[1,128], index: 9, kind: output, shape index: {}]
  %s10 = sld [smem:[#allocation0]]
  $region46: #{mlp_forward.1} parent=0
    _
  %s12 = ssub.s32 1, %s10
  %s13 = scalar_select 0, %s12, %s10
  %14 = sst [smem:[#allocation2]] %s8
  // Predicated region
  $region2: #{mlp_forward.1} parent=0 // pred_check
    _
  $region3: #{mlp_forward.1} parent=0 // pred_check_branch
    %16 = sbr.rel (0) target = $region5
  $region4: #{mlp_forward.1} parent=0 // pred_region
    _
  $region5: #{mlp_forward.1} parent=0 // pred_fallthru
    _
  // Predicated region
  $region6: #{mlp_forward.1} parent=0 // pred_check
    _
  $region7: #{mlp_forward.1} parent=0 // pred_check_branch
    %18 = sbr.rel (0) target = $region9
  $region8: #{mlp_forward.1} parent=0 // pred_region
    _
  $region9: #{mlp_forward.1} parent=0 // pred_fallthru
    _
  // Predicated region
  $region10: #{mlp_forward.1} parent=0 // pred_check
    _
  $region11: #{mlp_forward.1} parent=0 // pred_check_branch
    %20 = sbr.rel (0) target = $region13
  $region12: #{mlp_forward.1} parent=0 // pred_region
    _
  $region13: #{mlp_forward.1} parent=0 // pred_fallthru
    _
  // Predicated region
  $region14: #{mlp_forward.1} parent=0 // pred_check
    _
  $region15: #{mlp_forward.1} parent=0 // pred_check_branch
    %22 = sbr.rel (0) target = $region17
  $region16: #{mlp_forward.1} parent=0 // pred_region
    _
  $region17: #{mlp_forward.1} parent=0 // pred_fallthru
    _
  // Predicated region
  $region18: #{mlp_forward.1} parent=0 // pred_check
    _
  $region19: #{mlp_forward.1} parent=0 // pred_check_branch
    %24 = sbr.rel (0) target = $region21
  $region20: #{mlp_forward.1} parent=0 // pred_region
    _
  $region21: #{mlp_forward.1} parent=0 // pred_fallthru
    _
  // Predicated region
  $region22: #{mlp_forward.1} parent=0 // pred_check
    _
  $region23: #{mlp_forward.1} parent=0 // pred_check_branch
    %26 = sbr.rel (0) target = $region25
  $region24: #{mlp_forward.1} parent=0 // pred_region
    _
  $region25: #{mlp_forward.1} parent=0 // pred_fallthru
    _
  // Predicated region
  $region26: #{mlp_forward.1} parent=0 // pred_check
    _
  $region27: #{mlp_forward.1} parent=0 // pred_check_branch
    %28 = sbr.rel (0) target = $region29
  $region28: #{mlp_forward.1} parent=0 // pred_region
    _
  $region29: #{mlp_forward.1} parent=0 // pred_fallthru
    _
  // Predicated region
  $region30: #{mlp_forward.1} parent=0 // pred_check
    _
  $region31: #{mlp_forward.1} parent=0 // pred_check_branch
    %30 = sbr.rel (0) target = $region33
  $region32: #{mlp_forward.1} parent=0 // pred_region
    _
  $region33: #{mlp_forward.1} parent=0 // pred_fallthru
    _
  // Predicated region
  $region34: #{mlp_forward.1} parent=0 // pred_check
    _
  $region35: #{mlp_forward.1} parent=0 // pred_check_branch
    %32 = sbr.rel (0) target = $region37
  $region36: #{mlp_forward.1} parent=0 // pred_region
    _
  $region37: #{mlp_forward.1} parent=0 // pred_fallthru
    _
  %v33 = vld [vmem:[%s2] sm:$0xff]
  %v34 = vld [vmem:[%s2 + $0x8] sm:$0xff]
  %v35 = vld [vmem:[%s2 + $0x10] sm:$0xff]
  %v36 = vld [vmem:[%s2 + $0x18] sm:$0xff]
  %v37 = vld [vmem:[%s0] sm:$0xf]
  %v38 = vld [vmem:[%s3] sm:$0xff]
  %v39 = vld [vmem:[%s3 + $0x8] sm:$0xff]
  %v40 = vld [vmem:[%s3 + $0x10] sm:$0xff]
  %v41 = vld [vmem:[%s3 + $0x18] sm:$0xff]
  %v42 = vld [vmem:[%s1] sm:$0xf]
  %vm43 = vcmask 31744
  %v45 = vsel %vm43, %v38, 0
  %v48 = vsel %vm43, %v39, 0
  %v51 = vsel %vm43, %v40, 0
  %v54 = vsel %vm43, %v41, 0
  %vm56 = vcmask 1043456
  %v58 = vsel %vm56, %v42, 0
  %60 = vmatprep.subr.mxu0 0.0
  %v61 = vand.u32 %v58, 4294901760
  %62 = vmatpush1.msra.mxu0 %v61
  %63 = vmatprep.subr.mxu0 0.0
  %64 = vmatpush1.msra.mxu0 0.0
  %65 = vmatprep.subr.mxu0 0.0
  %66 = vmatpush1.msra.mxu0 0.0
  %67 = vmatprep.subr.mxu0 0.0
  %68 = vmatpush1.msra.mxu0 0.0
  %69 = vmatprep.subr.mxu0 0.0
  %70 = vmatpush1.msra.mxu0 0.0
  %71 = vmatprep.subr.mxu0 0.0
  %72 = vmatpush1.msra.mxu0 0.0
  %73 = vmatprep.subr.mxu0 0.0
  %74 = vmatpush1.msra.mxu0 0.0
  %75 = vmatprep.subr.mxu0 0.0
  %76 = vmatpush1.msra.mxu0 0.0
  %77 = vmatprep.subr.mxu0 0.0
  %78 = vmatpush1.msra.mxu0 0.0
  %79 = vmatprep.subr.mxu0 0.0
  %80 = vmatpush1.msra.mxu0 0.0
  %81 = vmatprep.subr.mxu0 0.0
  %82 = vmatpush1.msra.mxu0 0.0
  %83 = vmatprep.subr.mxu0 0.0
  %84 = vmatpush1.msra.mxu0 0.0
  %85 = vmatprep.subr.mxu0 0.0
  %86 = vmatpush1.msra.mxu0 0.0
  %87 = vmatprep.subr.mxu0 0.0
  %88 = vmatpush1.msra.mxu0 0.0
  %89 = vmatprep.subr.mxu0 0.0
  %90 = vmatpush1.msra.mxu0 0.0
  %91 = vmatprep.subr.mxu0 0.0
  %92 = vmatpush1.msra.mxu0 0.0
  %93 = vmatprep.subr.mxu0 0.0
  %94 = vmatpush1.msra.mxu0 0.0
  %95 = vmatprep.subr.mxu0 0.0
  %96 = vmatpush1.msra.mxu0 0.0
  %97 = vmatprep.subr.mxu0 0.0
  %98 = vmatpush1.msra.mxu0 0.0
  %99 = vmatprep.subr.mxu0 0.0
  %100 = vmatpush1.msra.mxu0 0.0
  %101 = vmatprep.subr.mxu0 0.0
  %102 = vmatpush1.msra.mxu0 0.0
  %103 = vmatprep.subr.mxu0 0.0
  %104 = vmatpush1.msra.mxu0 0.0
  %105 = vmatprep.subr.mxu0 0.0
  %106 = vmatpush1.msra.mxu0 0.0
  %107 = vmatprep.subr.mxu0 0.0
  %108 = vmatpush1.msra.mxu0 0.0
  %109 = vmatprep.subr.mxu0 0.0
  %110 = vmatpush1.msra.mxu0 0.0
  %111 = vmatprep.subr.mxu0 0.0
  %112 = vmatpush1.msra.mxu0 0.0
  %113 = vmatprep.subr.mxu0 0.0
  %114 = vmatpush1.msra.mxu0 0.0
  %115 = vmatprep.subr.mxu0 0.0
  %116 = vmatpush1.msra.mxu0 0.0
  %117 = vmatprep.subr.mxu0 0.0
  %118 = vmatpush1.msra.mxu0 0.0
  %119 = vmatprep.subr.mxu0 0.0
  %120 = vmatpush1.msra.mxu0 0.0
  %121 = vmatprep.subr.mxu0 0.0
  %122 = vmatpush1.msra.mxu0 0.0
  %123 = vmatprep.subr.mxu0 0.0
  %124 = vmatpush1.msra.mxu0 0.0
  %125 = vmatprep.mubr.f32.mxu0 0.0
  %v126 = vand.u32 %v45, 4294901760
  %v127 = vsub.f32 %v45, %v126
  %v128 = vand.u32 %v127, 4294901760
  %v129 = vsub.f32 %v127, %v128
  %v130 = vand.u32 %v129, 4294901760
  %131 = vmatmul.mubr.f32.gmra.mrb[0].mxu0 %v130
  %v132 = vpop.f32.mrb[0].mxu0
  %v133 = vadd.f32 0.0, %v132
  %v134 = vpop.f32.mrb[0].mxu0
  %135 = vmatprep.mubr.f32.mxu0 0.0
  %v136 = vand.u32 %v48, 4294901760
  %v137 = vsub.f32 %v48, %v136
  %v138 = vand.u32 %v137, 4294901760
  %v139 = vsub.f32 %v137, %v138
  %v140 = vand.u32 %v139, 4294901760
  %141 = vmatmul.mubr.f32.gmra.mrb[0].mxu0 %v140
  %v142 = vpop.f32.mrb[0].mxu0
  %v143 = vadd.f32 0.0, %v142
  %v144 = vpop.f32.mrb[0].mxu0
  %145 = vmatprep.mubr.f32.mxu0 0.0
  %v146 = vand.u32 %v51, 4294901760
  %v147 = vsub.f32 %v51, %v146
  %v148 = vand.u32 %v147, 4294901760
  %v149 = vsub.f32 %v147, %v148
  %v150 = vand.u32 %v149, 4294901760
  %151 = vmatmul.mubr.f32.gmra.mrb[0].mxu0 %v150
  %v152 = vpop.f32.mrb[0].mxu0
  %v153 = vadd.f32 0.0, %v152
  %v154 = vpop.f32.mrb[0].mxu0
  %155 = vmatprep.mubr.f32.mxu0 0.0
  %v156 = vand.u32 %v54, 4294901760
  %v157 = vsub.f32 %v54, %v156
  %v158 = vand.u32 %v157, 4294901760
  %v159 = vsub.f32 %v157, %v158
  %v160 = vand.u32 %v159, 4294901760
  %161 = vmatmul.mubr.f32.gmra.mrb[0].mxu0 %v160
  %v162 = vpop.f32.mrb[0].mxu0
  %v163 = vadd.f32 0.0, %v162
  %v164 = vpop.f32.mrb[0].mxu0
  %165 = vdwg.mxu0
  %166 = vmatprep.subr.mxu0 0.0
  %v167 = vand.u32 %v58, 4294901760
  %v168 = vsub.f32 %v58, %v167
  %v169 = vand.u32 %v168, 4294901760
  %v170 = vsub.f32 %v168, %v169
  %v171 = vand.u32 %v170, 4294901760
  %172 = vmatpush1.msra.mxu0 %v171
  %173 = vmatprep.subr.mxu0 0.0
  %174 = vmatpush1.msra.mxu0 0.0
  %175 = vmatprep.subr.mxu0 0.0
  %176 = vmatpush1.msra.mxu0 0.0
  %177 = vmatprep.subr.mxu0 0.0
  %178 = vmatpush1.msra.mxu0 0.0
  %179 = vmatprep.subr.mxu0 0.0
  %180 = vmatpush1.msra.mxu0 0.0
  %181 = vmatprep.subr.mxu0 0.0
  %182 = vmatpush1.msra.mxu0 0.0
  %183 = vmatprep.subr.mxu0 0.0
  %184 = vmatpush1.msra.mxu0 0.0
  %185 = vmatprep.subr.mxu0 0.0
  %186 = vmatpush1.msra.mxu0 0.0
  %187 = vmatprep.subr.mxu0 0.0
  %188 = vmatpush1.msra.mxu0 0.0
  %189 = vmatprep.subr.mxu0 0.0
  %190 = vmatpush1.msra.mxu0 0.0
  %191 = vmatprep.subr.mxu0 0.0
  %192 = vmatpush1.msra.mxu0 0.0
  %193 = vmatprep.subr.mxu0 0.0
  %194 = vmatpush1.msra.mxu0 0.0
  %195 = vmatprep.subr.mxu0 0.0
  %196 = vmatpush1.msra.mxu0 0.0
  %197 = vmatprep.subr.mxu0 0.0
  %198 = vmatpush1.msra.mxu0 0.0
  %199 = vmatprep.subr.mxu0 0.0
  %200 = vmatpush1.msra.mxu0 0.0
  %201 = vmatprep.subr.mxu0 0.0
  %202 = vmatpush1.msra.mxu0 0.0
  %203 = vmatprep.subr.mxu0 0.0
  %204 = vmatpush1.msra.mxu0 0.0
  %205 = vmatprep.subr.mxu0 0.0
  %206 = vmatpush1.msra.mxu0 0.0
  %207 = vmatprep.subr.mxu0 0.0
  %208 = vmatpush1.msra.mxu0 0.0
  %209 = vmatprep.subr.mxu0 0.0
  %210 = vmatpush1.msra.mxu0 0.0
  %211 = vmatprep.subr.mxu0 0.0
  %212 = vmatpush1.msra.mxu0 0.0
  %213 = vmatprep.subr.mxu0 0.0
  %214 = vmatpush1.msra.mxu0 0.0
  %215 = vmatprep.subr.mxu0 0.0
  %216 = vmatpush1.msra.mxu0 0.0
  %217 = vmatprep.subr.mxu0 0.0
  %218 = vmatpush1.msra.mxu0 0.0
  %219 = vmatprep.subr.mxu0 0.0
  %220 = vmatpush1.msra.mxu0 0.0
  %221 = vmatprep.subr.mxu0 0.0
  %222 = vmatpush1.msra.mxu0 0.0
  %223 = vmatprep.subr.mxu0 0.0
  %224 = vmatpush1.msra.mxu0 0.0
  %225 = vmatprep.subr.mxu0 0.0
  %226 = vmatpush1.msra.mxu0 0.0
  %227 = vmatprep.subr.mxu0 0.0
  %228 = vmatpush1.msra.mxu0 0.0
  %229 = vmatprep.subr.mxu0 0.0
  %230 = vmatpush1.msra.mxu0 0.0
  %231 = vmatprep.subr.mxu0 0.0
  %232 = vmatpush1.msra.mxu0 0.0
  %233 = vmatprep.subr.mxu0 0.0
  %234 = vmatpush1.msra.mxu0 0.0
  %235 = vmatprep.mubr.f32.mxu0 0.0
  %v236 = vand.u32 %v45, 4294901760
  %237 = vmatmul.mubr.f32.gmra.mrb[0].mxu0 %v236
  %v238 = vpop.f32.mrb[0].mxu0
  %v239 = vadd.f32 %v133, %v238
  %v240 = vpop.f32.mrb[0].mxu0
  %241 = vmatprep.mubr.f32.mxu0 0.0
  %v242 = vand.u32 %v48, 4294901760
  %243 = vmatmul.mubr.f32.gmra.mrb[0].mxu0 %v242
  %v244 = vpop.f32.mrb[0].mxu0
  %v245 = vadd.f32 %v143, %v244
  %v246 = vpop.f32.mrb[0].mxu0
  %247 = vmatprep.mubr.f32.mxu0 0.0
  %v248 = vand.u32 %v51, 4294901760
  %249 = vmatmul.mubr.f32.gmra.mrb[0].mxu0 %v248
  %v250 = vpop.f32.mrb[0].mxu0
  %v251 = vadd.f32 %v153, %v250
  %v252 = vpop.f32.mrb[0].mxu0
  %253 = vmatprep.mubr.f32.mxu0 0.0
  %v254 = vand.u32 %v54, 4294901760
  %255 = vmatmul.mubr.f32.gmra.mrb[0].mxu0 %v254
  %v256 = vpop.f32.mrb[0].mxu0
  %v257 = vadd.f32 %v163, %v256
  %v258 = vpop.f32.mrb[0].mxu0
  %259 = vdwg.mxu0
  %260 = vmatprep.subr.mxu0 0.0
  %v261 = vand.u32 %v58, 4294901760
  %v262 = vsub.f32 %v58, %v261
  %263 = vmatpush1.msra.mxu0 %v262
  %264 = vmatprep.subr.mxu0 0.0
  %265 = vmatpush1.msra.mxu0 0.0
  %266 = vmatprep.subr.mxu0 0.0
  %267 = vmatpush1.msra.mxu0 0.0
  %268 = vmatprep.subr.mxu0 0.0
  %269 = vmatpush1.msra.mxu0 0.0
  %270 = vmatprep.subr.mxu0 0.0
  %271 = vmatpush1.msra.mxu0 0.0
  %272 = vmatprep.subr.mxu0 0.0
  %273 = vmatpush1.msra.mxu0 0.0
  %274 = vmatprep.subr.mxu0 0.0
  %275 = vmatpush1.msra.mxu0 0.0
  %276 = vmatprep.subr.mxu0 0.0
  %277 = vmatpush1.msra.mxu0 0.0
  %278 = vmatprep.subr.mxu0 0.0
  %279 = vmatpush1.msra.mxu0 0.0
  %280 = vmatprep.subr.mxu0 0.0
  %281 = vmatpush1.msra.mxu0 0.0
  %282 = vmatprep.subr.mxu0 0.0
  %283 = vmatpush1.msra.mxu0 0.0
  %284 = vmatprep.subr.mxu0 0.0
  %285 = vmatpush1.msra.mxu0 0.0
  %286 = vmatprep.subr.mxu0 0.0
  %287 = vmatpush1.msra.mxu0 0.0
  %288 = vmatprep.subr.mxu0 0.0
  %289 = vmatpush1.msra.mxu0 0.0
  %290 = vmatprep.subr.mxu0 0.0
  %291 = vmatpush1.msra.mxu0 0.0
  %292 = vmatprep.subr.mxu0 0.0
  %293 = vmatpush1.msra.mxu0 0.0
  %294 = vmatprep.subr.mxu0 0.0
  %295 = vmatpush1.msra.mxu0 0.0
  %296 = vmatprep.subr.mxu0 0.0
  %297 = vmatpush1.msra.mxu0 0.0
  %298 = vmatprep.subr.mxu0 0.0
  %299 = vmatpush1.msra.mxu0 0.0
  %300 = vmatprep.subr.mxu0 0.0
  %301 = vmatpush1.msra.mxu0 0.0
  %302 = vmatprep.subr.mxu0 0.0
  %303 = vmatpush1.msra.mxu0 0.0
  %304 = vmatprep.subr.mxu0 0.0
  %305 = vmatpush1.msra.mxu0 0.0
  %306 = vmatprep.subr.mxu0 0.0
  %307 = vmatpush1.msra.mxu0 0.0
  %308 = vmatprep.subr.mxu0 0.0
  %309 = vmatpush1.msra.mxu0 0.0
  %310 = vmatprep.subr.mxu0 0.0
  %311 = vmatpush1.msra.mxu0 0.0
  %312 = vmatprep.subr.mxu0 0.0
  %313 = vmatpush1.msra.mxu0 0.0
  %314 = vmatprep.subr.mxu0 0.0
  %315 = vmatpush1.msra.mxu0 0.0
  %316 = vmatprep.subr.mxu0 0.0
  %317 = vmatpush1.msra.mxu0 0.0
  %318 = vmatprep.subr.mxu0 0.0
  %319 = vmatpush1.msra.mxu0 0.0
  %320 = vmatprep.subr.mxu0 0.0
  %321 = vmatpush1.msra.mxu0 0.0
  %322 = vmatprep.subr.mxu0 0.0
  %323 = vmatpush1.msra.mxu0 0.0
  %324 = vmatprep.subr.mxu0 0.0
  %325 = vmatpush1.msra.mxu0 0.0
  %326 = vmatprep.mubr.f32.mxu0 0.0
  %v327 = vand.u32 %v45, 4294901760
  %v328 = vsub.f32 %v45, %v327
  %329 = vmatmul.mubr.f32.gmra.mrb[0].mxu0 %v328
  %v330 = vpop.f32.mrb[0].mxu0
  %v331 = vadd.f32 %v239, %v330
  %v332 = vpop.f32.mrb[0].mxu0
  %333 = vmatprep.mubr.f32.mxu0 0.0
  %v334 = vand.u32 %v48, 4294901760
  %v335 = vsub.f32 %v48, %v334
  %336 = vmatmul.mubr.f32.gmra.mrb[0].mxu0 %v335
  %v337 = vpop.f32.mrb[0].mxu0
  %v338 = vadd.f32 %v245, %v337
  %v339 = vpop.f32.mrb[0].mxu0
  %340 = vmatprep.mubr.f32.mxu0 0.0
  %v341 = vand.u32 %v51, 4294901760
  %v342 = vsub.f32 %v51, %v341
  %343 = vmatmul.mubr.f32.gmra.mrb[0].mxu0 %v342
  %v344 = vpop.f32.mrb[0].mxu0
  %v345 = vadd.f32 %v251, %v344
  %v346 = vpop.f32.mrb[0].mxu0
  %347 = vmatprep.mubr.f32.mxu0 0.0
  %v348 = vand.u32 %v54, 4294901760
  %v349 = vsub.f32 %v54, %v348
  %350 = vmatmul.mubr.f32.gmra.mrb[0].mxu0 %v349
  %v351 = vpop.f32.mrb[0].mxu0
  %v352 = vadd.f32 %v257, %v351
  %v353 = vpop.f32.mrb[0].mxu0
  %354 = vdwg.mxu0
  %355 = vmatprep.subr.mxu0 0.0
  %v356 = vand.u32 %v58, 4294901760
  %357 = vmatpush1.msra.mxu0 %v356
  %358 = vmatprep.subr.mxu0 0.0
  %359 = vmatpush1.msra.mxu0 0.0
  %360 = vmatprep.subr.mxu0 0.0
  %361 = vmatpush1.msra.mxu0 0.0
  %362 = vmatprep.subr.mxu0 0.0
  %363 = vmatpush1.msra.mxu0 0.0
  %364 = vmatprep.subr.mxu0 0.0
  %365 = vmatpush1.msra.mxu0 0.0
  %366 = vmatprep.subr.mxu0 0.0
  %367 = vmatpush1.msra.mxu0 0.0
  %368 = vmatprep.subr.mxu0 0.0
  %369 = vmatpush1.msra.mxu0 0.0
  %370 = vmatprep.subr.mxu0 0.0
  %371 = vmatpush1.msra.mxu0 0.0
  %372 = vmatprep.subr.mxu0 0.0
  %373 = vmatpush1.msra.mxu0 0.0
  %374 = vmatprep.subr.mxu0 0.0
  %375 = vmatpush1.msra.mxu0 0.0
  %376 = vmatprep.subr.mxu0 0.0
  %377 = vmatpush1.msra.mxu0 0.0
  %378 = vmatprep.subr.mxu0 0.0
  %379 = vmatpush1.msra.mxu0 0.0
  %380 = vmatprep.subr.mxu0 0.0
  %381 = vmatpush1.msra.mxu0 0.0
  %382 = vmatprep.subr.mxu0 0.0
  %383 = vmatpush1.msra.mxu0 0.0
  %384 = vmatprep.subr.mxu0 0.0
  %385 = vmatpush1.msra.mxu0 0.0
  %386 = vmatprep.subr.mxu0 0.0
  %387 = vmatpush1.msra.mxu0 0.0
  %388 = vmatprep.subr.mxu0 0.0
  %389 = vmatpush1.msra.mxu0 0.0
  %390 = vmatprep.subr.mxu0 0.0
  %391 = vmatpush1.msra.mxu0 0.0
  %392 = vmatprep.subr.mxu0 0.0
  %393 = vmatpush1.msra.mxu0 0.0
  %394 = vmatprep.subr.mxu0 0.0
  %395 = vmatpush1.msra.mxu0 0.0
  %396 = vmatprep.subr.mxu0 0.0
  %397 = vmatpush1.msra.mxu0 0.0
  %398 = vmatprep.subr.mxu0 0.0
  %399 = vmatpush1.msra.mxu0 0.0
  %400 = vmatprep.subr.mxu0 0.0
  %401 = vmatpush1.msra.mxu0 0.0
  %402 = vmatprep.subr.mxu0 0.0
  %403 = vmatpush1.msra.mxu0 0.0
  %404 = vmatprep.subr.mxu0 0.0
  %405 = vmatpush1.msra.mxu0 0.0
  %406 = vmatprep.subr.mxu0 0.0
  %407 = vmatpush1.msra.mxu0 0.0
  %408 = vmatprep.subr.mxu0 0.0
  %409 = vmatpush1.msra.mxu0 0.0
  %410 = vmatprep.subr.mxu0 0.0
  %411 = vmatpush1.msra.mxu0 0.0
  %412 = vmatprep.subr.mxu0 0.0
  %413 = vmatpush1.msra.mxu0 0.0
  %414 = vmatprep.subr.mxu0 0.0
  %415 = vmatpush1.msra.mxu0 0.0
  %416 = vmatprep.subr.mxu0 0.0
  %417 = vmatpush1.msra.mxu0 0.0
  %418 = vmatprep.subr.mxu0 0.0
  %419 = vmatpush1.msra.mxu0 0.0
  %420 = vmatprep.mubr.f32.mxu0 0.0
  %v421 = vand.u32 %v45, 4294901760
  %v422 = vsub.f32 %v45, %v421
  %v423 = vand.u32 %v422, 4294901760
  %424 = vmatmul.mubr.f32.gmra.mrb[0].mxu0 %v423
  %v425 = vpop.f32.mrb[0].mxu0
  %v426 = vadd.f32 %v331, %v425
  %v427 = vpop.f32.mrb[0].mxu0
  %428 = vmatprep.mubr.f32.mxu0 0.0
  %v429 = vand.u32 %v48, 4294901760
  %v430 = vsub.f32 %v48, %v429
  %v431 = vand.u32 %v430, 4294901760
  %432 = vmatmul.mubr.f32.gmra.mrb[0].mxu0 %v431
  %v433 = vpop.f32.mrb[0].mxu0
  %v434 = vadd.f32 %v338, %v433
  %v435 = vpop.f32.mrb[0].mxu0
  %436 = vmatprep.mubr.f32.mxu0 0.0
  %v437 = vand.u32 %v51, 4294901760
  %v438 = vsub.f32 %v51, %v437
  %v439 = vand.u32 %v438, 4294901760
  %440 = vmatmul.mubr.f32.gmra.mrb[0].mxu0 %v439
  %v441 = vpop.f32.mrb[0].mxu0
  %v442 = vadd.f32 %v345, %v441
  %v443 = vpop.f32.mrb[0].mxu0
  %444 = vmatprep.mubr.f32.mxu0 0.0
  %v445 = vand.u32 %v54, 4294901760
  %v446 = vsub.f32 %v54, %v445
  %v447 = vand.u32 %v446, 4294901760
  %448 = vmatmul.mubr.f32.gmra.mrb[0].mxu0 %v447
  %v449 = vpop.f32.mrb[0].mxu0
  %v450 = vadd.f32 %v352, %v449
  %v451 = vpop.f32.mrb[0].mxu0
  %452 = vdwg.mxu0
  %453 = vmatprep.subr.mxu0 0.0
  %v454 = vand.u32 %v58, 4294901760
  %v455 = vsub.f32 %v58, %v454
  %v456 = vand.u32 %v455, 4294901760
  %457 = vmatpush1.msra.mxu0 %v456
  %458 = vmatprep.subr.mxu0 0.0
  %459 = vmatpush1.msra.mxu0 0.0
  %460 = vmatprep.subr.mxu0 0.0
  %461 = vmatpush1.msra.mxu0 0.0
  %462 = vmatprep.subr.mxu0 0.0
  %463 = vmatpush1.msra.mxu0 0.0
  %464 = vmatprep.subr.mxu0 0.0
  %465 = vmatpush1.msra.mxu0 0.0
  %466 = vmatprep.subr.mxu0 0.0
  %467 = vmatpush1.msra.mxu0 0.0
  %468 = vmatprep.subr.mxu0 0.0
  %469 = vmatpush1.msra.mxu0 0.0
  %470 = vmatprep.subr.mxu0 0.0
  %471 = vmatpush1.msra.mxu0 0.0
  %472 = vmatprep.subr.mxu0 0.0
  %473 = vmatpush1.msra.mxu0 0.0
  %474 = vmatprep.subr.mxu0 0.0
  %475 = vmatpush1.msra.mxu0 0.0
  %476 = vmatprep.subr.mxu0 0.0
  %477 = vmatpush1.msra.mxu0 0.0
  %478 = vmatprep.subr.mxu0 0.0
  %479 = vmatpush1.msra.mxu0 0.0
  %480 = vmatprep.subr.mxu0 0.0
  %481 = vmatpush1.msra.mxu0 0.0
  %482 = vmatprep.subr.mxu0 0.0
  %483 = vmatpush1.msra.mxu0 0.0
  %484 = vmatprep.subr.mxu0 0.0
  %485 = vmatpush1.msra.mxu0 0.0
  %486 = vmatprep.subr.mxu0 0.0
  %487 = vmatpush1.msra.mxu0 0.0
  %488 = vmatprep.subr.mxu0 0.0
  %489 = vmatpush1.msra.mxu0 0.0
  %490 = vmatprep.subr.mxu0 0.0
  %491 = vmatpush1.msra.mxu0 0.0
  %492 = vmatprep.subr.mxu0 0.0
  %493 = vmatpush1.msra.mxu0 0.0
  %494 = vmatprep.subr.mxu0 0.0
  %495 = vmatpush1.msra.mxu0 0.0
  %496 = vmatprep.subr.mxu0 0.0
  %497 = vmatpush1.msra.mxu0 0.0
  %498 = vmatprep.subr.mxu0 0.0
  %499 = vmatpush1.msra.mxu0 0.0
  %500 = vmatprep.subr.mxu0 0.0
  %501 = vmatpush1.msra.mxu0 0.0
  %502 = vmatprep.subr.mxu0 0.0
  %503 = vmatpush1.msra.mxu0 0.0
  %504 = vmatprep.subr.mxu0 0.0
  %505 = vmatpush1.msra.mxu0 0.0
  %506 = vmatprep.subr.mxu0 0.0
  %507 = vmatpush1.msra.mxu0 0.0
  %508 = vmatprep.subr.mxu0 0.0
  %509 = vmatpush1.msra.mxu0 0.0
  %510 = vmatprep.subr.mxu0 0.0
  %511 = vmatpush1.msra.mxu0 0.0
  %512 = vmatprep.subr.mxu0 0.0
  %513 = vmatpush1.msra.mxu0 0.0
  %514 = vmatprep.subr.mxu0 0.0
  %515 = vmatpush1.msra.mxu0 0.0
  %516 = vmatprep.subr.mxu0 0.0
  %517 = vmatpush1.msra.mxu0 0.0
  %518 = vmatprep.subr.mxu0 0.0
  %519 = vmatpush1.msra.mxu0 0.0
  %520 = vmatprep.mubr.f32.mxu0 0.0
  %v521 = vand.u32 %v45, 4294901760
  %522 = vmatmul.mubr.f32.gmra.mrb[0].mxu0 %v521
  %v523 = vpop.f32.mrb[0].mxu0
  %v524 = vadd.f32 %v426, %v523
  %v525 = vpop.f32.mrb[0].mxu0
  %526 = vmatprep.mubr.f32.mxu0 0.0
  %v527 = vand.u32 %v48, 4294901760
  %528 = vmatmul.mubr.f32.gmra.mrb[0].mxu0 %v527
  %v529 = vpop.f32.mrb[0].mxu0
  %v530 = vadd.f32 %v434, %v529
  %v531 = vpop.f32.mrb[0].mxu0
  %532 = vmatprep.mubr.f32.mxu0 0.0
  %v533 = vand.u32 %v51, 4294901760
  %534 = vmatmul.mubr.f32.gmra.mrb[0].mxu0 %v533
  %v535 = vpop.f32.mrb[0].mxu0
  %v536 = vadd.f32 %v442, %v535
  %v537 = vpop.f32.mrb[0].mxu0
  %538 = vmatprep.mubr.f32.mxu0 0.0
  %v539 = vand.u32 %v54, 4294901760
  %540 = vmatmul.mubr.f32.gmra.mrb[0].mxu0 %v539
  %v541 = vpop.f32.mrb[0].mxu0
  %v542 = vadd.f32 %v450, %v541
  %v543 = vpop.f32.mrb[0].mxu0
  %544 = vdwg.mxu0
  %545 = vmatprep.subr.mxu0 0.0
  %v546 = vand.u32 %v58, 4294901760
  %547 = vmatpush1.msra.mxu0 %v546
  %548 = vmatprep.subr.mxu0 0.0
  %549 = vmatpush1.msra.mxu0 0.0
  %550 = vmatprep.subr.mxu0 0.0
  %551 = vmatpush1.msra.mxu0 0.0
  %552 = vmatprep.subr.mxu0 0.0
  %553 = vmatpush1.msra.mxu0 0.0
  %554 = vmatprep.subr.mxu0 0.0
  %555 = vmatpush1.msra.mxu0 0.0
  %556 = vmatprep.subr.mxu0 0.0
  %557 = vmatpush1.msra.mxu0 0.0
  %558 = vmatprep.subr.mxu0 0.0
  %559 = vmatpush1.msra.mxu0 0.0
  %560 = vmatprep.subr.mxu0 0.0
  %561 = vmatpush1.msra.mxu0 0.0
  %562 = vmatprep.subr.mxu0 0.0
  %563 = vmatpush1.msra.mxu0 0.0
  %564 = vmatprep.subr.mxu0 0.0
  %565 = vmatpush1.msra.mxu0 0.0
  %566 = vmatprep.subr.mxu0 0.0
  %567 = vmatpush1.msra.mxu0 0.0
  %568 = vmatprep.subr.mxu0 0.0
  %569 = vmatpush1.msra.mxu0 0.0
  %570 = vmatprep.subr.mxu0 0.0
  %571 = vmatpush1.msra.mxu0 0.0
  %572 = vmatprep.subr.mxu0 0.0
  %573 = vmatpush1.msra.mxu0 0.0
  %574 = vmatprep.subr.mxu0 0.0
  %575 = vmatpush1.msra.mxu0 0.0
  %576 = vmatprep.subr.mxu0 0.0
  %577 = vmatpush1.msra.mxu0 0.0
  %578 = vmatprep.subr.mxu0 0.0
  %579 = vmatpush1.msra.mxu0 0.0
  %580 = vmatprep.subr.mxu0 0.0
  %581 = vmatpush1.msra.mxu0 0.0
  %582 = vmatprep.subr.mxu0 0.0
  %583 = vmatpush1.msra.mxu0 0.0
  %584 = vmatprep.subr.mxu0 0.0
  %585 = vmatpush1.msra.mxu0 0.0
  %586 = vmatprep.subr.mxu0 0.0
  %587 = vmatpush1.msra.mxu0 0.0
  %588 = vmatprep.subr.mxu0 0.0
  %589 = vmatpush1.msra.mxu0 0.0
  %590 = vmatprep.subr.mxu0 0.0
  %591 = vmatpush1.msra.mxu0 0.0
  %592 = vmatprep.subr.mxu0 0.0
  %593 = vmatpush1.msra.mxu0 0.0
  %594 = vmatprep.subr.mxu0 0.0
  %595 = vmatpush1.msra.mxu0 0.0
  %596 = vmatprep.subr.mxu0 0.0
  %597 = vmatpush1.msra.mxu0 0.0
  %598 = vmatprep.subr.mxu0 0.0
  %599 = vmatpush1.msra.mxu0 0.0
  %600 = vmatprep.subr.mxu0 0.0
  %601 = vmatpush1.msra.mxu0 0.0
  %602 = vmatprep.subr.mxu0 0.0
  %603 = vmatpush1.msra.mxu0 0.0
  %604 = vmatprep.subr.mxu0 0.0
  %605 = vmatpush1.msra.mxu0 0.0
  %606 = vmatprep.subr.mxu0 0.0
  %607 = vmatpush1.msra.mxu0 0.0
  %608 = vmatprep.subr.mxu0 0.0
  %609 = vmatpush1.msra.mxu0 0.0
  %610 = vmatprep.mubr.f32.mxu0 0.0
  %v611 = vand.u32 %v45, 4294901760
  %612 = vmatmul.mubr.f32.gmra.mrb[0].mxu0 %v611
  %v613 = vpop.f32.mrb[0].mxu0
  %v614 = vadd.f32 %v524, %v613
  %v615 = vpop.f32.mrb[0].mxu0
  %616 = vmatprep.mubr.f32.mxu0 0.0
  %v617 = vand.u32 %v48, 4294901760
  %618 = vmatmul.mubr.f32.gmra.mrb[0].mxu0 %v617
  %v619 = vpop.f32.mrb[0].mxu0
  %v620 = vadd.f32 %v530, %v619
  %v621 = vpop.f32.mrb[0].mxu0
  %622 = vmatprep.mubr.f32.mxu0 0.0
  %v623 = vand.u32 %v51, 4294901760
  %624 = vmatmul.mubr.f32.gmra.mrb[0].mxu0 %v623
  %v625 = vpop.f32.mrb[0].mxu0
  %v626 = vadd.f32 %v536, %v625
  %v627 = vpop.f32.mrb[0].mxu0
  %628 = vmatprep.mubr.f32.mxu0 0.0
  %v629 = vand.u32 %v54, 4294901760
  %630 = vmatmul.mubr.f32.gmra.mrb[0].mxu0 %v629
  %v631 = vpop.f32.mrb[0].mxu0
  %v632 = vadd.f32 %v542, %v631
  %v633 = vpop.f32.mrb[0].mxu0
  %634 = vdwg.mxu0
  %v636 = vsel %vm43, %v33, 0
  %v639 = vsel %vm43, %v34, 0
  %v642 = vsel %vm43, %v35, 0
  %v645 = vsel %vm43, %v36, 0
  %v648 = vsel %vm56, %v37, 0
  %650 = vmatprep.subr.mxu0 0.0
  %v651 = vand.u32 %v648, 4294901760
  %652 = vmatpush1.msra.mxu0 %v651
  %653 = vmatprep.subr.mxu0 0.0
  %654 = vmatpush1.msra.mxu0 0.0
  %655 = vmatprep.subr.mxu0 0.0
  %656 = vmatpush1.msra.mxu0 0.0
  %657 = vmatprep.subr.mxu0 0.0
  %658 = vmatpush1.msra.mxu0 0.0
  %659 = vmatprep.subr.mxu0 0.0
  %660 = vmatpush1.msra.mxu0 0.0
  %661 = vmatprep.subr.mxu0 0.0
  %662 = vmatpush1.msra.mxu0 0.0
  %663 = vmatprep.subr.mxu0 0.0
  %664 = vmatpush1.msra.mxu0 0.0
  %665 = vmatprep.subr.mxu0 0.0
  %666 = vmatpush1.msra.mxu0 0.0
  %667 = vmatprep.subr.mxu0 0.0
  %668 = vmatpush1.msra.mxu0 0.0
  %669 = vmatprep.subr.mxu0 0.0
  %670 = vmatpush1.msra.mxu0 0.0
  %671 = vmatprep.subr.mxu0 0.0
  %672 = vmatpush1.msra.mxu0 0.0
  %673 = vmatprep.subr.mxu0 0.0
  %674 = vmatpush1.msra.mxu0 0.0
  %675 = vmatprep.subr.mxu0 0.0
  %676 = vmatpush1.msra.mxu0 0.0
  %677 = vmatprep.subr.mxu0 0.0
  %678 = vmatpush1.msra.mxu0 0.0
  %679 = vmatprep.subr.mxu0 0.0
  %680 = vmatpush1.msra.mxu0 0.0
  %681 = vmatprep.subr.mxu0 0.0
  %682 = vmatpush1.msra.mxu0 0.0
  %683 = vmatprep.subr.mxu0 0.0
  %684 = vmatpush1.msra.mxu0 0.0
  %685 = vmatprep.subr.mxu0 0.0
  %686 = vmatpush1.msra.mxu0 0.0
  %687 = vmatprep.subr.mxu0 0.0
  %688 = vmatpush1.msra.mxu0 0.0
  %689 = vmatprep.subr.mxu0 0.0
  %690 = vmatpush1.msra.mxu0 0.0
  %691 = vmatprep.subr.mxu0 0.0
  %692 = vmatpush1.msra.mxu0 0.0
  %693 = vmatprep.subr.mxu0 0.0
  %694 = vmatpush1.msra.mxu0 0.0
  %695 = vmatprep.subr.mxu0 0.0
  %696 = vmatpush1.msra.mxu0 0.0
  %697 = vmatprep.subr.mxu0 0.0
  %698 = vmatpush1.msra.mxu0 0.0
  %699 = vmatprep.subr.mxu0 0.0
  %700 = vmatpush1.msra.mxu0 0.0
  %701 = vmatprep.subr.mxu0 0.0
  %702 = vmatpush1.msra.mxu0 0.0
  %703 = vmatprep.subr.mxu0 0.0
  %704 = vmatpush1.msra.mxu0 0.0
  %705 = vmatprep.subr.mxu0 0.0
  %706 = vmatpush1.msra.mxu0 0.0
  %707 = vmatprep.subr.mxu0 0.0
  %708 = vmatpush1.msra.mxu0 0.0
  %709 = vmatprep.subr.mxu0 0.0
  %710 = vmatpush1.msra.mxu0 0.0
  %711 = vmatprep.subr.mxu0 0.0
  %712 = vmatpush1.msra.mxu0 0.0
  %713 = vmatprep.subr.mxu0 0.0
  %714 = vmatpush1.msra.mxu0 0.0
  %715 = vmatprep.mubr.f32.mxu0 0.0
  %v716 = vand.u32 %v636, 4294901760
  %v717 = vsub.f32 %v636, %v716
  %v718 = vand.u32 %v717, 4294901760
  %v719 = vsub.f32 %v717, %v718
  %v720 = vand.u32 %v719, 4294901760
  %721 = vmatmul.mubr.f32.gmra.mrb[0].mxu0 %v720
  %v722 = vpop.f32.mrb[0].mxu0
  %v723 = vadd.f32 %v614, %v722
  %v724 = vpop.f32.mrb[0].mxu0
  %725 = vmatprep.mubr.f32.mxu0 0.0
  %v726 = vand.u32 %v639, 4294901760
  %v727 = vsub.f32 %v639, %v726
  %v728 = vand.u32 %v727, 4294901760
  %v729 = vsub.f32 %v727, %v728
  %v730 = vand.u32 %v729, 4294901760
  %731 = vmatmul.mubr.f32.gmra.mrb[0].mxu0 %v730
  %v732 = vpop.f32.mrb[0].mxu0
  %v733 = vadd.f32 %v620, %v732
  %v734 = vpop.f32.mrb[0].mxu0
  %735 = vmatprep.mubr.f32.mxu0 0.0
  %v736 = vand.u32 %v642, 4294901760
  %v737 = vsub.f32 %v642, %v736
  %v738 = vand.u32 %v737, 4294901760
  %v739 = vsub.f32 %v737, %v738
  %v740 = vand.u32 %v739, 4294901760
  %741 = vmatmul.mubr.f32.gmra.mrb[0].mxu0 %v740
  %v742 = vpop.f32.mrb[0].mxu0
  %v743 = vadd.f32 %v626, %v742
  %v744 = vpop.f32.mrb[0].mxu0
  %745 = vmatprep.mubr.f32.mxu0 0.0
  %v746 = vand.u32 %v645, 4294901760
  %v747 = vsub.f32 %v645, %v746
  %v748 = vand.u32 %v747, 4294901760
  %v749 = vsub.f32 %v747, %v748
  %v750 = vand.u32 %v749, 4294901760
  %751 = vmatmul.mubr.f32.gmra.mrb[0].mxu0 %v750
  %v752 = vpop.f32.mrb[0].mxu0
  %v753 = vadd.f32 %v632, %v752
  %v754 = vpop.f32.mrb[0].mxu0
  %755 = vdwg.mxu0
  %756 = vmatprep.subr.mxu0 0.0
  %v757 = vand.u32 %v648, 4294901760
  %v758 = vsub.f32 %v648, %v757
  %v759 = vand.u32 %v758, 4294901760
  %v760 = vsub.f32 %v758, %v759
  %v761 = vand.u32 %v760, 4294901760
  %762 = vmatpush1.msra.mxu0 %v761
  %763 = vmatprep.subr.mxu0 0.0
  %764 = vmatpush1.msra.mxu0 0.0
  %765 = vmatprep.subr.mxu0 0.0
  %766 = vmatpush1.msra.mxu0 0.0
  %767 = vmatprep.subr.mxu0 0.0
  %768 = vmatpush1.msra.mxu0 0.0
  %769 = vmatprep.subr.mxu0 0.0
  %770 = vmatpush1.msra.mxu0 0.0
  %771 = vmatprep.subr.mxu0 0.0
  %772 = vmatpush1.msra.mxu0 0.0
  %773 = vmatprep.subr.mxu0 0.0
  %774 = vmatpush1.msra.mxu0 0.0
  %775 = vmatprep.subr.mxu0 0.0
  %776 = vmatpush1.msra.mxu0 0.0
  %777 = vmatprep.subr.mxu0 0.0
  %778 = vmatpush1.msra.mxu0 0.0
  %779 = vmatprep.subr.mxu0 0.0
  %780 = vmatpush1.msra.mxu0 0.0
  %781 = vmatprep.subr.mxu0 0.0
  %782 = vmatpush1.msra.mxu0 0.0
  %783 = vmatprep.subr.mxu0 0.0
  %784 = vmatpush1.msra.mxu0 0.0
  %785 = vmatprep.subr.mxu0 0.0
  %786 = vmatpush1.msra.mxu0 0.0
  %787 = vmatprep.subr.mxu0 0.0
  %788 = vmatpush1.msra.mxu0 0.0
  %789 = vmatprep.subr.mxu0 0.0
  %790 = vmatpush1.msra.mxu0 0.0
  %791 = vmatprep.subr.mxu0 0.0
  %792 = vmatpush1.msra.mxu0 0.0
  %793 = vmatprep.subr.mxu0 0.0
  %794 = vmatpush1.msra.mxu0 0.0
  %795 = vmatprep.subr.mxu0 0.0
  %796 = vmatpush1.msra.mxu0 0.0
  %797 = vmatprep.subr.mxu0 0.0
  %798 = vmatpush1.msra.mxu0 0.0
  %799 = vmatprep.subr.mxu0 0.0
  %800 = vmatpush1.msra.mxu0 0.0
  %801 = vmatprep.subr.mxu0 0.0
  %802 = vmatpush1.msra.mxu0 0.0
  %803 = vmatprep.subr.mxu0 0.0
  %804 = vmatpush1.msra.mxu0 0.0
  %805 = vmatprep.subr.mxu0 0.0
  %806 = vmatpush1.msra.mxu0 0.0
  %807 = vmatprep.subr.mxu0 0.0
  %808 = vmatpush1.msra.mxu0 0.0
  %809 = vmatprep.subr.mxu0 0.0
  %810 = vmatpush1.msra.mxu0 0.0
  %811 = vmatprep.subr.mxu0 0.0
  %812 = vmatpush1.msra.mxu0 0.0
  %813 = vmatprep.subr.mxu0 0.0
  %814 = vmatpush1.msra.mxu0 0.0
  %815 = vmatprep.subr.mxu0 0.0
  %816 = vmatpush1.msra.mxu0 0.0
  %817 = vmatprep.subr.mxu0 0.0
  %818 = vmatpush1.msra.mxu0 0.0
  %819 = vmatprep.subr.mxu0 0.0
  %820 = vmatpush1.msra.mxu0 0.0
  %821 = vmatprep.subr.mxu0 0.0
  %822 = vmatpush1.msra.mxu0 0.0
  %823 = vmatprep.subr.mxu0 0.0
  %824 = vmatpush1.msra.mxu0 0.0
  %825 = vmatprep.mubr.f32.mxu0 0.0
  %v826 = vand.u32 %v636, 4294901760
  %827 = vmatmul.mubr.f32.gmra.mrb[0].mxu0 %v826
  %v828 = vpop.f32.mrb[0].mxu0
  %v829 = vadd.f32 %v723, %v828
  %v830 = vpop.f32.mrb[0].mxu0
  %831 = vmatprep.mubr.f32.mxu0 0.0
  %v832 = vand.u32 %v639, 4294901760
  %833 = vmatmul.mubr.f32.gmra.mrb[0].mxu0 %v832
  %v834 = vpop.f32.mrb[0].mxu0
  %v835 = vadd.f32 %v733, %v834
  %v836 = vpop.f32.mrb[0].mxu0
  %837 = vmatprep.mubr.f32.mxu0 0.0
  %v838 = vand.u32 %v642, 4294901760
  %839 = vmatmul.mubr.f32.gmra.mrb[0].mxu0 %v838
  %v840 = vpop.f32.mrb[0].mxu0
  %v841 = vadd.f32 %v743, %v840
  %v842 = vpop.f32.mrb[0].mxu0
  %843 = vmatprep.mubr.f32.mxu0 0.0
  %v844 = vand.u32 %v645, 4294901760
  %845 = vmatmul.mubr.f32.gmra.mrb[0].mxu0 %v844
  %v846 = vpop.f32.mrb[0].mxu0
  %v847 = vadd.f32 %v753, %v846
  %v848 = vpop.f32.mrb[0].mxu0
  %849 = vdwg.mxu0
  %850 = vmatprep.subr.mxu0 0.0
  %v851 = vand.u32 %v648, 4294901760
  %v852 = vsub.f32 %v648, %v851
  %853 = vmatpush1.msra.mxu0 %v852
  %854 = vmatprep.subr.mxu0 0.0
  %855 = vmatpush1.msra.mxu0 0.0
  %856 = vmatprep.subr.mxu0 0.0
  %857 = vmatpush1.msra.mxu0 0.0
  %858 = vmatprep.subr.mxu0 0.0
  %859 = vmatpush1.msra.mxu0 0.0
  %860 = vmatprep.subr.mxu0 0.0
  %861 = vmatpush1.msra.mxu0 0.0
  %862 = vmatprep.subr.mxu0 0.0
  %863 = vmatpush1.msra.mxu0 0.0
  %864 = vmatprep.subr.mxu0 0.0
  %865 = vmatpush1.msra.mxu0 0.0
  %866 = vmatprep.subr.mxu0 0.0
  %867 = vmatpush1.msra.mxu0 0.0
  %868 = vmatprep.subr.mxu0 0.0
  %869 = vmatpush1.msra.mxu0 0.0
  %870 = vmatprep.subr.mxu0 0.0
  %871 = vmatpush1.msra.mxu0 0.0
  %872 = vmatprep.subr.mxu0 0.0
  %873 = vmatpush1.msra.mxu0 0.0
  %874 = vmatprep.subr.mxu0 0.0
  %875 = vmatpush1.msra.mxu0 0.0
  %876 = vmatprep.subr.mxu0 0.0
  %877 = vmatpush1.msra.mxu0 0.0
  %878 = vmatprep.subr.mxu0 0.0
  %879 = vmatpush1.msra.mxu0 0.0
  %880 = vmatprep.subr.mxu0 0.0
  %881 = vmatpush1.msra.mxu0 0.0
  %882 = vmatprep.subr.mxu0 0.0
  %883 = vmatpush1.msra.mxu0 0.0
  %884 = vmatprep.subr.mxu0 0.0
  %885 = vmatpush1.msra.mxu0 0.0
  %886 = vmatprep.subr.mxu0 0.0
  %887 = vmatpush1.msra.mxu0 0.0
  %888 = vmatprep.subr.mxu0 0.0
  %889 = vmatpush1.msra.mxu0 0.0
  %890 = vmatprep.subr.mxu0 0.0
  %891 = vmatpush1.msra.mxu0 0.0
  %892 = vmatprep.subr.mxu0 0.0
  %893 = vmatpush1.msra.mxu0 0.0
  %894 = vmatprep.subr.mxu0 0.0
  %895 = vmatpush1.msra.mxu0 0.0
  %896 = vmatprep.subr.mxu0 0.0
  %897 = vmatpush1.msra.mxu0 0.0
  %898 = vmatprep.subr.mxu0 0.0
  %899 = vmatpush1.msra.mxu0 0.0
  %900 = vmatprep.subr.mxu0 0.0
  %901 = vmatpush1.msra.mxu0 0.0
  %902 = vmatprep.subr.mxu0 0.0
  %903 = vmatpush1.msra.mxu0 0.0
  %904 = vmatprep.subr.mxu0 0.0
  %905 = vmatpush1.msra.mxu0 0.0
  %906 = vmatprep.subr.mxu0 0.0
  %907 = vmatpush1.msra.mxu0 0.0
  %908 = vmatprep.subr.mxu0 0.0
  %909 = vmatpush1.msra.mxu0 0.0
  %910 = vmatprep.subr.mxu0 0.0
  %911 = vmatpush1.msra.mxu0 0.0
  %912 = vmatprep.subr.mxu0 0.0
  %913 = vmatpush1.msra.mxu0 0.0
  %914 = vmatprep.subr.mxu0 0.0
  %915 = vmatpush1.msra.mxu0 0.0
  %916 = vmatprep.mubr.f32.mxu0 0.0
  %v917 = vand.u32 %v636, 4294901760
  %v918 = vsub.f32 %v636, %v917
  %919 = vmatmul.mubr.f32.gmra.mrb[0].mxu0 %v918
  %v920 = vpop.f32.mrb[0].mxu0
  %v921 = vadd.f32 %v829, %v920
  %v922 = vpop.f32.mrb[0].mxu0
  %923 = vmatprep.mubr.f32.mxu0 0.0
  %v924 = vand.u32 %v639, 4294901760
  %v925 = vsub.f32 %v639, %v924
  %926 = vmatmul.mubr.f32.gmra.mrb[0].mxu0 %v925
  %v927 = vpop.f32.mrb[0].mxu0
  %v928 = vadd.f32 %v835, %v927
  %v929 = vpop.f32.mrb[0].mxu0
  %930 = vmatprep.mubr.f32.mxu0 0.0
  %v931 = vand.u32 %v642, 4294901760
  %v932 = vsub.f32 %v642, %v931
  %933 = vmatmul.mubr.f32.gmra.mrb[0].mxu0 %v932
  %v934 = vpop.f32.mrb[0].mxu0
  %v935 = vadd.f32 %v841, %v934
  %v936 = vpop.f32.mrb[0].mxu0
  %937 = vmatprep.mubr.f32.mxu0 0.0
  %v938 = vand.u32 %v645, 4294901760
  %v939 = vsub.f32 %v645, %v938
  %940 = vmatmul.mubr.f32.gmra.mrb[0].mxu0 %v939
  %v941 = vpop.f32.mrb[0].mxu0
  %v942 = vadd.f32 %v847, %v941
  %v943 = vpop.f32.mrb[0].mxu0
  %944 = vdwg.mxu0
  %945 = vmatprep.subr.mxu0 0.0
  %v946 = vand.u32 %v648, 4294901760
  %947 = vmatpush1.msra.mxu0 %v946
  %948 = vmatprep.subr.mxu0 0.0
  %949 = vmatpush1.msra.mxu0 0.0
  %950 = vmatprep.subr.mxu0 0.0
  %951 = vmatpush1.msra.mxu0 0.0
  %952 = vmatprep.subr.mxu0 0.0
  %953 = vmatpush1.msra.mxu0 0.0
  %954 = vmatprep.subr.mxu0 0.0
  %955 = vmatpush1.msra.mxu0 0.0
  %956 = vmatprep.subr.mxu0 0.0
  %957 = vmatpush1.msra.mxu0 0.0
  %958 = vmatprep.subr.mxu0 0.0
  %959 = vmatpush1.msra.mxu0 0.0
  %960 = vmatprep.subr.mxu0 0.0
  %961 = vmatpush1.msra.mxu0 0.0
  %962 = vmatprep.subr.mxu0 0.0
  %963 = vmatpush1.msra.mxu0 0.0
  %964 = vmatprep.subr.mxu0 0.0
  %965 = vmatpush1.msra.mxu0 0.0
  %966 = vmatprep.subr.mxu0 0.0
  %967 = vmatpush1.msra.mxu0 0.0
  %968 = vmatprep.subr.mxu0 0.0
  %969 = vmatpush1.msra.mxu0 0.0
  %970 = vmatprep.subr.mxu0 0.0
  %971 = vmatpush1.msra.mxu0 0.0
  %972 = vmatprep.subr.mxu0 0.0
  %973 = vmatpush1.msra.mxu0 0.0
  %974 = vmatprep.subr.mxu0 0.0
  %975 = vmatpush1.msra.mxu0 0.0
  %976 = vmatprep.subr.mxu0 0.0
  %977 = vmatpush1.msra.mxu0 0.0
  %978 = vmatprep.subr.mxu0 0.0
  %979 = vmatpush1.msra.mxu0 0.0
  %980 = vmatprep.subr.mxu0 0.0
  %981 = vmatpush1.msra.mxu0 0.0
  %982 = vmatprep.subr.mxu0 0.0
  %983 = vmatpush1.msra.mxu0 0.0
  %984 = vmatprep.subr.mxu0 0.0
  %985 = vmatpush1.msra.mxu0 0.0
  %986 = vmatprep.subr.mxu0 0.0
  %987 = vmatpush1.msra.mxu0 0.0
  %988 = vmatprep.subr.mxu0 0.0
  %989 = vmatpush1.msra.mxu0 0.0
  %990 = vmatprep.subr.mxu0 0.0
  %991 = vmatpush1.msra.mxu0 0.0
  %992 = vmatprep.subr.mxu0 0.0
  %993 = vmatpush1.msra.mxu0 0.0
  %994 = vmatprep.subr.mxu0 0.0
  %995 = vmatpush1.msra.mxu0 0.0
  %996 = vmatprep.subr.mxu0 0.0
  %997 = vmatpush1.msra.mxu0 0.0
  %998 = vmatprep.subr.mxu0 0.0
  %999 = vmatpush1.msra.mxu0 0.0
  %1000 = vmatprep.subr.mxu0 0.0
  %1001 = vmatpush1.msra.mxu0 0.0
  %1002 = vmatprep.subr.mxu0 0.0
  %1003 = vmatpush1.msra.mxu0 0.0
  %1004 = vmatprep.subr.mxu0 0.0
  %1005 = vmatpush1.msra.mxu0 0.0
  %1006 = vmatprep.subr.mxu0 0.0
  %1007 = vmatpush1.msra.mxu0 0.0
  %1008 = vmatprep.subr.mxu0 0.0
  %1009 = vmatpush1.msra.mxu0 0.0
  %1010 = vmatprep.mubr.f32.mxu0 0.0
  %v1011 = vand.u32 %v636, 4294901760
  %v1012 = vsub.f32 %v636, %v1011
  %v1013 = vand.u32 %v1012, 4294901760
  %1014 = vmatmul.mubr.f32.gmra.mrb[0].mxu0 %v1013
  %v1015 = vpop.f32.mrb[0].mxu0
  %v1016 = vadd.f32 %v921, %v1015
  %v1017 = vpop.f32.mrb[0].mxu0
  %1018 = vmatprep.mubr.f32.mxu0 0.0
  %v1019 = vand.u32 %v639, 4294901760
  %v1020 = vsub.f32 %v639, %v1019
  %v1021 = vand.u32 %v1020, 4294901760
  %1022 = vmatmul.mubr.f32.gmra.mrb[0].mxu0 %v1021
  %v1023 = vpop.f32.mrb[0].mxu0
  %v1024 = vadd.f32 %v928, %v1023
  %v1025 = vpop.f32.mrb[0].mxu0
  %1026 = vmatprep.mubr.f32.mxu0 0.0
  %v1027 = vand.u32 %v642, 4294901760
  %v1028 = vsub.f32 %v642, %v1027
  %v1029 = vand.u32 %v1028, 4294901760
  %1030 = vmatmul.mubr.f32.gmra.mrb[0].mxu0 %v1029
  %v1031 = vpop.f32.mrb[0].mxu0
  %v1032 = vadd.f32 %v935, %v1031
  %v1033 = vpop.f32.mrb[0].mxu0
  %1034 = vmatprep.mubr.f32.mxu0 0.0
  %v1035 = vand.u32 %v645, 4294901760
  %v1036 = vsub.f32 %v645, %v1035
  %v1037 = vand.u32 %v1036, 4294901760
  %1038 = vmatmul.mubr.f32.gmra.mrb[0].mxu0 %v1037
  %v1039 = vpop.f32.mrb[0].mxu0
  %v1040 = vadd.f32 %v942, %v1039
  %v1041 = vpop.f32.mrb[0].mxu0
  %1042 = vdwg.mxu0
  %1043 = vmatprep.subr.mxu0 0.0
  %v1044 = vand.u32 %v648, 4294901760
  %v1045 = vsub.f32 %v648, %v1044
  %v1046 = vand.u32 %v1045, 4294901760
  %1047 = vmatpush1.msra.mxu0 %v1046
  %1048 = vmatprep.subr.mxu0 0.0
  %1049 = vmatpush1.msra.mxu0 0.0
  %1050 = vmatprep.subr.mxu0 0.0
  %1051 = vmatpush1.msra.mxu0 0.0
  %1052 = vmatprep.subr.mxu0 0.0
  %1053 = vmatpush1.msra.mxu0 0.0
  %1054 = vmatprep.subr.mxu0 0.0
  %1055 = vmatpush1.msra.mxu0 0.0
  %1056 = vmatprep.subr.mxu0 0.0
  %1057 = vmatpush1.msra.mxu0 0.0
  %1058 = vmatprep.subr.mxu0 0.0
  %1059 = vmatpush1.msra.mxu0 0.0
  %1060 = vmatprep.subr.mxu0 0.0
  %1061 = vmatpush1.msra.mxu0 0.0
  %1062 = vmatprep.subr.mxu0 0.0
  %1063 = vmatpush1.msra.mxu0 0.0
  %1064 = vmatprep.subr.mxu0 0.0
  %1065 = vmatpush1.msra.mxu0 0.0
  %1066 = vmatprep.subr.mxu0 0.0
  %1067 = vmatpush1.msra.mxu0 0.0
  %1068 = vmatprep.subr.mxu0 0.0
  %1069 = vmatpush1.msra.mxu0 0.0
  %1070 = vmatprep.subr.mxu0 0.0
  %1071 = vmatpush1.msra.mxu0 0.0
  %1072 = vmatprep.subr.mxu0 0.0
  %1073 = vmatpush1.msra.mxu0 0.0
  %1074 = vmatprep.subr.mxu0 0.0
  %1075 = vmatpush1.msra.mxu0 0.0
  %1076 = vmatprep.subr.mxu0 0.0
  %1077 = vmatpush1.msra.mxu0 0.0
  %1078 = vmatprep.subr.mxu0 0.0
  %1079 = vmatpush1.msra.mxu0 0.0
  %1080 = vmatprep.subr.mxu0 0.0
  %1081 = vmatpush1.msra.mxu0 0.0
  %1082 = vmatprep.subr.mxu0 0.0
  %1083 = vmatpush1.msra.mxu0 0.0
  %1084 = vmatprep.subr.mxu0 0.0
  %1085 = vmatpush1.msra.mxu0 0.0
  %1086 = vmatprep.subr.mxu0 0.0
  %1087 = vmatpush1.msra.mxu0 0.0
  %1088 = vmatprep.subr.mxu0 0.0
  %1089 = vmatpush1.msra.mxu0 0.0
  %1090 = vmatprep.subr.mxu0 0.0
  %1091 = vmatpush1.msra.mxu0 0.0
  %1092 = vmatprep.subr.mxu0 0.0
  %1093 = vmatpush1.msra.mxu0 0.0
  %1094 = vmatprep.subr.mxu0 0.0
  %1095 = vmatpush1.msra.mxu0 0.0
  %1096 = vmatprep.subr.mxu0 0.0
  %1097 = vmatpush1.msra.mxu0 0.0
  %1098 = vmatprep.subr.mxu0 0.0
  %1099 = vmatpush1.msra.mxu0 0.0
  %1100 = vmatprep.subr.mxu0 0.0
  %1101 = vmatpush1.msra.mxu0 0.0
  %1102 = vmatprep.subr.mxu0 0.0
  %1103 = vmatpush1.msra.mxu0 0.0
  %1104 = vmatprep.subr.mxu0 0.0
  %1105 = vmatpush1.msra.mxu0 0.0
  %1106 = vmatprep.subr.mxu0 0.0
  %1107 = vmatpush1.msra.mxu0 0.0
  %1108 = vmatprep.subr.mxu0 0.0
  %1109 = vmatpush1.msra.mxu0 0.0
  %1110 = vmatprep.mubr.f32.mxu0 0.0
  %v1111 = vand.u32 %v636, 4294901760
  %1112 = vmatmul.mubr.f32.gmra.mrb[0].mxu0 %v1111
  %v1113 = vpop.f32.mrb[0].mxu0
  %v1114 = vadd.f32 %v1016, %v1113
  %v1115 = vpop.f32.mrb[0].mxu0
  %1116 = vmatprep.mubr.f32.mxu0 0.0
  %v1117 = vand.u32 %v639, 4294901760
  %1118 = vmatmul.mubr.f32.gmra.mrb[0].mxu0 %v1117
  %v1119 = vpop.f32.mrb[0].mxu0
  %v1120 = vadd.f32 %v1024, %v1119
  %v1121 = vpop.f32.mrb[0].mxu0
  %1122 = vmatprep.mubr.f32.mxu0 0.0
  %v1123 = vand.u32 %v642, 4294901760
  %1124 = vmatmul.mubr.f32.gmra.mrb[0].mxu0 %v1123
  %v1125 = vpop.f32.mrb[0].mxu0
  %v1126 = vadd.f32 %v1032, %v1125
  %v1127 = vpop.f32.mrb[0].mxu0
  %1128 = vmatprep.mubr.f32.mxu0 0.0
  %v1129 = vand.u32 %v645, 4294901760
  %1130 = vmatmul.mubr.f32.gmra.mrb[0].mxu0 %v1129
  %v1131 = vpop.f32.mrb[0].mxu0
  %v1132 = vadd.f32 %v1040, %v1131
  %v1133 = vpop.f32.mrb[0].mxu0
  %1134 = vdwg.mxu0
  %1135 = vmatprep.subr.mxu0 0.0
  %v1136 = vand.u32 %v648, 4294901760
  %1137 = vmatpush1.msra.mxu0 %v1136
  %1138 = vmatprep.subr.mxu0 0.0
  %1139 = vmatpush1.msra.mxu0 0.0
  %1140 = vmatprep.subr.mxu0 0.0
  %1141 = vmatpush1.msra.mxu0 0.0
  %1142 = vmatprep.subr.mxu0 0.0
  %1143 = vmatpush1.msra.mxu0 0.0
  %1144 = vmatprep.subr.mxu0 0.0
  %1145 = vmatpush1.msra.mxu0 0.0
  %1146 = vmatprep.subr.mxu0 0.0
  %1147 = vmatpush1.msra.mxu0 0.0
  %1148 = vmatprep.subr.mxu0 0.0
  %1149 = vmatpush1.msra.mxu0 0.0
  %1150 = vmatprep.subr.mxu0 0.0
  %1151 = vmatpush1.msra.mxu0 0.0
  %1152 = vmatprep.subr.mxu0 0.0
  %1153 = vmatpush1.msra.mxu0 0.0
  %1154 = vmatprep.subr.mxu0 0.0
  %1155 = vmatpush1.msra.mxu0 0.0
  %1156 = vmatprep.subr.mxu0 0.0
  %1157 = vmatpush1.msra.mxu0 0.0
  %1158 = vmatprep.subr.mxu0 0.0
  %1159 = vmatpush1.msra.mxu0 0.0
  %1160 = vmatprep.subr.mxu0 0.0
  %1161 = vmatpush1.msra.mxu0 0.0
  %1162 = vmatprep.subr.mxu0 0.0
  %1163 = vmatpush1.msra.mxu0 0.0
  %1164 = vmatprep.subr.mxu0 0.0
  %1165 = vmatpush1.msra.mxu0 0.0
  %1166 = vmatprep.subr.mxu0 0.0
  %1167 = vmatpush1.msra.mxu0 0.0
  %1168 = vmatprep.subr.mxu0 0.0
  %1169 = vmatpush1.msra.mxu0 0.0
  %1170 = vmatprep.subr.mxu0 0.0
  %1171 = vmatpush1.msra.mxu0 0.0
  %1172 = vmatprep.subr.mxu0 0.0
  %1173 = vmatpush1.msra.mxu0 0.0
  %1174 = vmatprep.subr.mxu0 0.0
  %1175 = vmatpush1.msra.mxu0 0.0
  %1176 = vmatprep.subr.mxu0 0.0
  %1177 = vmatpush1.msra.mxu0 0.0
  %1178 = vmatprep.subr.mxu0 0.0
  %1179 = vmatpush1.msra.mxu0 0.0
  %1180 = vmatprep.subr.mxu0 0.0
  %1181 = vmatpush1.msra.mxu0 0.0
  %1182 = vmatprep.subr.mxu0 0.0
  %1183 = vmatpush1.msra.mxu0 0.0
  %1184 = vmatprep.subr.mxu0 0.0
  %1185 = vmatpush1.msra.mxu0 0.0
  %1186 = vmatprep.subr.mxu0 0.0
  %1187 = vmatpush1.msra.mxu0 0.0
  %1188 = vmatprep.subr.mxu0 0.0
  %1189 = vmatpush1.msra.mxu0 0.0
  %1190 = vmatprep.subr.mxu0 0.0
  %1191 = vmatpush1.msra.mxu0 0.0
  %1192 = vmatprep.subr.mxu0 0.0
  %1193 = vmatpush1.msra.mxu0 0.0
  %1194 = vmatprep.subr.mxu0 0.0
  %1195 = vmatpush1.msra.mxu0 0.0
  %1196 = vmatprep.subr.mxu0 0.0
  %1197 = vmatpush1.msra.mxu0 0.0
  %1198 = vmatprep.subr.mxu0 0.0
  %1199 = vmatpush1.msra.mxu0 0.0
  %1200 = vmatprep.mubr.f32.mxu0 0.0
  %v1201 = vand.u32 %v636, 4294901760
  %1202 = vmatmul.mubr.f32.gmra.mrb[0].mxu0 %v1201
  %v1203 = vpop.f32.mrb[0].mxu0
  %v1204 = vadd.f32 %v1114, %v1203
  %v1205 = vpop.f32.mrb[0].mxu0
  %1206 = vmatprep.mubr.f32.mxu0 0.0
  %v1207 = vand.u32 %v639, 4294901760
  %1208 = vmatmul.mubr.f32.gmra.mrb[0].mxu0 %v1207
  %v1209 = vpop.f32.mrb[0].mxu0
  %v1210 = vadd.f32 %v1120, %v1209
  %v1211 = vpop.f32.mrb[0].mxu0
  %1212 = vmatprep.mubr.f32.mxu0 0.0
  %v1213 = vand.u32 %v642, 4294901760
  %1214 = vmatmul.mubr.f32.gmra.mrb[0].mxu0 %v1213
  %v1215 = vpop.f32.mrb[0].mxu0
  %v1216 = vadd.f32 %v1126, %v1215
  %v1217 = vpop.f32.mrb[0].mxu0
  %1218 = vmatprep.mubr.f32.mxu0 0.0
  %v1219 = vand.u32 %v645, 4294901760
  %1220 = vmatmul.mubr.f32.gmra.mrb[0].mxu0 %v1219
  %v1221 = vpop.f32.mrb[0].mxu0
  %v1222 = vadd.f32 %v1132, %v1221
  %v1223 = vpop.f32.mrb[0].mxu0
  %1224 = vdwg.mxu0
  %v1225 = vld [vmem:[%s4] sm:$0xff]
  %v1226 = vld [vmem:[%s4 + $0x8] sm:$0xff]
  %v1227 = vld [vmem:[%s4 + $0x10] sm:$0xff]
  %v1228 = vld [vmem:[%s4 + $0x18] sm:$0xff]
  %1230 = vset.pattern.permute.xlu0 0
  %1231 = vperm.xlu0 %1230, %v1225
  %v1232 = vpop.permute.xlu0 %1231
  %1235 = vset.pattern.permute.xlu0 0
  %1236 = vperm.xlu0 %1235, %v1226
  %v1237 = vpop.permute.xlu0 %1236
  %1240 = vset.pattern.permute.xlu0 0
  %1241 = vperm.xlu0 %1240, %v1227
  %v1242 = vpop.permute.xlu0 %1241
  %1245 = vset.pattern.permute.xlu0 0
  %1246 = vperm.xlu0 %1245, %v1228
  %v1247 = vpop.permute.xlu0 %1246
  %v1249 = vadd.f32 %v1204, %v1232
  %v1250 = vadd.f32 %v1210, %v1237
  %v1251 = vadd.f32 %v1216, %v1242
  %v1252 = vadd.f32 %v1222, %v1247
  %v1253 = vmax.f32 %v1249, 0.0
  %v1254 = vmax.f32 %v1250, 0.0
  %v1255 = vmax.f32 %v1251, 0.0
  %v1256 = vmax.f32 %v1252, 0.0
  %v1257 = vmin.f32 %v1253, 6.0
  %v1258 = vmin.f32 %v1254, 6.0
  %v1259 = vmin.f32 %v1255, 6.0
  %v1260 = vmin.f32 %v1256, 6.0
  %v1261 = vld [vmem:[%s5] sm:$0xff]
  %v1262 = vld [vmem:[%s5 + $0x8] sm:$0xff]
  %v1263 = vld [vmem:[%s5 + $0x10] sm:$0xff]
  %v1264 = vld [vmem:[%s5 + $0x18] sm:$0xff]
  %v1265 = vld [vmem:[%s6] sm:$0xff]
  %v1266 = vld [vmem:[%s6 + $0x8] sm:$0xff]
  %v1267 = vld [vmem:[%s6 + $0x10] sm:$0xff]
  %v1268 = vld [vmem:[%s6 + $0x18] sm:$0xff]
  %1270 = vset.pattern.permute.xlu0 0
  %1271 = vperm.xlu0 %1270, %v1265
  %v1272 = vpop.permute.xlu0 %1271
  %1275 = vset.pattern.permute.xlu0 0
  %1276 = vperm.xlu0 %1275, %v1266
  %v1277 = vpop.permute.xlu0 %1276
  %1280 = vset.pattern.permute.xlu0 0
  %1281 = vperm.xlu0 %1280, %v1267
  %v1282 = vpop.permute.xlu0 %1281
  %1285 = vset.pattern.permute.xlu0 0
  %1286 = vperm.xlu0 %1285, %v1268
  %v1287 = vpop.permute.xlu0 %1286
  %vm1289 = vcmask 261120
  %v1291 = vsel %vm1289, %v1261, 0
  %v1294 = vsel %vm1289, %v1262, 0
  %v1297 = vsel %vm1289, %v1263, 0
  %v1300 = vsel %vm1289, %v1264, 0
  %1302 = vmatprep.subr.mxu0 0.0
  %v1303 = vand.u32 %v1257, 4294901760
  %1304 = vmatpush1.msra.mxu0 %v1303
  %1305 = vmatprep.subr.mxu0 0.0
  %v1306 = vand.u32 %v1258, 4294901760
  %1307 = vmatpush1.msra.mxu0 %v1306
  %1308 = vmatprep.subr.mxu0 0.0
  %v1309 = vand.u32 %v1259, 4294901760
  %1310 = vmatpush1.msra.mxu0 %v1309
  %1311 = vmatprep.subr.mxu0 0.0
  %v1312 = vand.u32 %v1260, 4294901760
  %1313 = vmatpush1.msra.mxu0 %v1312
  %1314 = vmatprep.subr.mxu0 0.0
  %1315 = vmatpush1.msra.mxu0 0.0
  %1316 = vmatprep.subr.mxu0 0.0
  %1317 = vmatpush1.msra.mxu0 0.0
  %1318 = vmatprep.subr.mxu0 0.0
  %1319 = vmatpush1.msra.mxu0 0.0
  %1320 = vmatprep.subr.mxu0 0.0
  %1321 = vmatpush1.msra.mxu0 0.0
  %1322 = vmatprep.subr.mxu0 0.0
  %1323 = vmatpush1.msra.mxu0 0.0
  %1324 = vmatprep.subr.mxu0 0.0
  %1325 = vmatpush1.msra.mxu0 0.0
  %1326 = vmatprep.subr.mxu0 0.0
  %1327 = vmatpush1.msra.mxu0 0.0
  %1328 = vmatprep.subr.mxu0 0.0
  %1329 = vmatpush1.msra.mxu0 0.0
  %1330 = vmatprep.subr.mxu0 0.0
  %1331 = vmatpush1.msra.mxu0 0.0
  %1332 = vmatprep.subr.mxu0 0.0
  %1333 = vmatpush1.msra.mxu0 0.0
  %1334 = vmatprep.subr.mxu0 0.0
  %1335 = vmatpush1.msra.mxu0 0.0
  %1336 = vmatprep.subr.mxu0 0.0
  %1337 = vmatpush1.msra.mxu0 0.0
  %1338 = vmatprep.subr.mxu0 0.0
  %1339 = vmatpush1.msra.mxu0 0.0
  %1340 = vmatprep.subr.mxu0 0.0
  %1341 = vmatpush1.msra.mxu0 0.0
  %1342 = vmatprep.subr.mxu0 0.0
  %1343 = vmatpush1.msra.mxu0 0.0
  %1344 = vmatprep.subr.mxu0 0.0
  %1345 = vmatpush1.msra.mxu0 0.0
  %1346 = vmatprep.subr.mxu0 0.0
  %1347 = vmatpush1.msra.mxu0 0.0
  %1348 = vmatprep.subr.mxu0 0.0
  %1349 = vmatpush1.msra.mxu0 0.0
  %1350 = vmatprep.subr.mxu0 0.0
  %1351 = vmatpush1.msra.mxu0 0.0
  %1352 = vmatprep.subr.mxu0 0.0
  %1353 = vmatpush1.msra.mxu0 0.0
  %1354 = vmatprep.subr.mxu0 0.0
  %1355 = vmatpush1.msra.mxu0 0.0
  %1356 = vmatprep.subr.mxu0 0.0
  %1357 = vmatpush1.msra.mxu0 0.0
  %1358 = vmatprep.subr.mxu0 0.0
  %1359 = vmatpush1.msra.mxu0 0.0
  %1360 = vmatprep.subr.mxu0 0.0
  %1361 = vmatpush1.msra.mxu0 0.0
  %1362 = vmatprep.subr.mxu0 0.0
  %1363 = vmatpush1.msra.mxu0 0.0
  %1364 = vmatprep.subr.mxu0 0.0
  %1365 = vmatpush1.msra.mxu0 0.0
  %1366 = vmatprep.subr.mxu0 0.0
  %1367 = vmatpush1.msra.mxu0 0.0
  %1368 = vmatprep.subr.mxu0 0.0
  %1369 = vmatpush1.msra.mxu0 0.0
  %1370 = vmatprep.mubr.f32.mxu0 0.0
  %v1371 = vand.u32 %v1291, 4294901760
  %v1372 = vsub.f32 %v1291, %v1371
  %v1373 = vand.u32 %v1372, 4294901760
  %v1374 = vsub.f32 %v1372, %v1373
  %v1375 = vand.u32 %v1374, 4294901760
  %1376 = vmatmul.mubr.f32.gmra.mrb[0].mxu0 %v1375
  %v1377 = vpop.f32.mrb[0].mxu0
  %v1378 = vadd.f32 %v1272, %v1377
  %v1379 = vpop.f32.mrb[0].mxu0
  %1380 = vmatprep.mubr.f32.mxu0 0.0
  %v1381 = vand.u32 %v1294, 4294901760
  %v1382 = vsub.f32 %v1294, %v1381
  %v1383 = vand.u32 %v1382, 4294901760
  %v1384 = vsub.f32 %v1382, %v1383
  %v1385 = vand.u32 %v1384, 4294901760
  %1386 = vmatmul.mubr.f32.gmra.mrb[0].mxu0 %v1385
  %v1387 = vpop.f32.mrb[0].mxu0
  %v1388 = vadd.f32 %v1277, %v1387
  %v1389 = vpop.f32.mrb[0].mxu0
  %1390 = vmatprep.mubr.f32.mxu0 0.0
  %v1391 = vand.u32 %v1297, 4294901760
  %v1392 = vsub.f32 %v1297, %v1391
  %v1393 = vand.u32 %v1392, 4294901760
  %v1394 = vsub.f32 %v1392, %v1393
  %v1395 = vand.u32 %v1394, 4294901760
  %1396 = vmatmul.mubr.f32.gmra.mrb[0].mxu0 %v1395
  %v1397 = vpop.f32.mrb[0].mxu0
  %v1398 = vadd.f32 %v1282, %v1397
  %v1399 = vpop.f32.mrb[0].mxu0
  %1400 = vmatprep.mubr.f32.mxu0 0.0
  %v1401 = vand.u32 %v1300, 4294901760
  %v1402 = vsub.f32 %v1300, %v1401
  %v1403 = vand.u32 %v1402, 4294901760
  %v1404 = vsub.f32 %v1402, %v1403
  %v1405 = vand.u32 %v1404, 4294901760
  %1406 = vmatmul.mubr.f32.gmra.mrb[0].mxu0 %v1405
  %v1407 = vpop.f32.mrb[0].mxu0
  %v1408 = vadd.f32 %v1287, %v1407
  %v1409 = vpop.f32.mrb[0].mxu0
  %1410 = vdwg.mxu0
  %1411 = vmatprep.subr.mxu0 0.0
  %v1412 = vand.u32 %v1257, 4294901760
  %v1413 = vsub.f32 %v1257, %v1412
  %v1414 = vand.u32 %v1413, 4294901760
  %v1415 = vsub.f32 %v1413, %v1414
  %v1416 = vand.u32 %v1415, 4294901760
  %1417 = vmatpush1.msra.mxu0 %v1416
  %1418 = vmatprep.subr.mxu0 0.0
  %v1419 = vand.u32 %v1258, 4294901760
  %v1420 = vsub.f32 %v1258, %v1419
  %v1421 = vand.u32 %v1420, 4294901760
  %v1422 = vsub.f32 %v1420, %v1421
  %v1423 = vand.u32 %v1422, 4294901760
  %1424 = vmatpush1.msra.mxu0 %v1423
  %1425 = vmatprep.subr.mxu0 0.0
  %v1426 = vand.u32 %v1259, 4294901760
  %v1427 = vsub.f32 %v1259, %v1426
  %v1428 = vand.u32 %v1427, 4294901760
  %v1429 = vsub.f32 %v1427, %v1428
  %v1430 = vand.u32 %v1429, 4294901760
  %1431 = vmatpush1.msra.mxu0 %v1430
  %1432 = vmatprep.subr.mxu0 0.0
  %v1433 = vand.u32 %v1260, 4294901760
  %v1434 = vsub.f32 %v1260, %v1433
  %v1435 = vand.u32 %v1434, 4294901760
  %v1436 = vsub.f32 %v1434, %v1435
  %v1437 = vand.u32 %v1436, 4294901760
  %1438 = vmatpush1.msra.mxu0 %v1437
  %1439 = vmatprep.subr.mxu0 0.0
  %1440 = vmatpush1.msra.mxu0 0.0
  %1441 = vmatprep.subr.mxu0 0.0
  %1442 = vmatpush1.msra.mxu0 0.0
  %1443 = vmatprep.subr.mxu0 0.0
  %1444 = vmatpush1.msra.mxu0 0.0
  %1445 = vmatprep.subr.mxu0 0.0
  %1446 = vmatpush1.msra.mxu0 0.0
  %1447 = vmatprep.subr.mxu0 0.0
  %1448 = vmatpush1.msra.mxu0 0.0
  %1449 = vmatprep.subr.mxu0 0.0
  %1450 = vmatpush1.msra.mxu0 0.0
  %1451 = vmatprep.subr.mxu0 0.0
  %1452 = vmatpush1.msra.mxu0 0.0
  %1453 = vmatprep.subr.mxu0 0.0
  %1454 = vmatpush1.msra.mxu0 0.0
  %1455 = vmatprep.subr.mxu0 0.0
  %1456 = vmatpush1.msra.mxu0 0.0
  %1457 = vmatprep.subr.mxu0 0.0
  %1458 = vmatpush1.msra.mxu0 0.0
  %1459 = vmatprep.subr.mxu0 0.0
  %1460 = vmatpush1.msra.mxu0 0.0
  %1461 = vmatprep.subr.mxu0 0.0
  %1462 = vmatpush1.msra.mxu0 0.0
  %1463 = vmatprep.subr.mxu0 0.0
  %1464 = vmatpush1.msra.mxu0 0.0
  %1465 = vmatprep.subr.mxu0 0.0
  %1466 = vmatpush1.msra.mxu0 0.0
  %1467 = vmatprep.subr.mxu0 0.0
  %1468 = vmatpush1.msra.mxu0 0.0
  %1469 = vmatprep.subr.mxu0 0.0
  %1470 = vmatpush1.msra.mxu0 0.0
  %1471 = vmatprep.subr.mxu0 0.0
  %1472 = vmatpush1.msra.mxu0 0.0
  %1473 = vmatprep.subr.mxu0 0.0
  %1474 = vmatpush1.msra.mxu0 0.0
  %1475 = vmatprep.subr.mxu0 0.0
  %1476 = vmatpush1.msra.mxu0 0.0
  %1477 = vmatprep.subr.mxu0 0.0
  %1478 = vmatpush1.msra.mxu0 0.0
  %1479 = vmatprep.subr.mxu0 0.0
  %1480 = vmatpush1.msra.mxu0 0.0
  %1481 = vmatprep.subr.mxu0 0.0
  %1482 = vmatpush1.msra.mxu0 0.0
  %1483 = vmatprep.subr.mxu0 0.0
  %1484 = vmatpush1.msra.mxu0 0.0
  %1485 = vmatprep.subr.mxu0 0.0
  %1486 = vmatpush1.msra.mxu0 0.0
  %1487 = vmatprep.subr.mxu0 0.0
  %1488 = vmatpush1.msra.mxu0 0.0
  %1489 = vmatprep.subr.mxu0 0.0
  %1490 = vmatpush1.msra.mxu0 0.0
  %1491 = vmatprep.subr.mxu0 0.0
  %1492 = vmatpush1.msra.mxu0 0.0
  %1493 = vmatprep.subr.mxu0 0.0
  %1494 = vmatpush1.msra.mxu0 0.0
  %1495 = vmatprep.mubr.f32.mxu0 0.0
  %v1496 = vand.u32 %v1291, 4294901760
  %1497 = vmatmul.mubr.f32.gmra.mrb[0].mxu0 %v1496
  %v1498 = vpop.f32.mrb[0].mxu0
  %v1499 = vadd.f32 %v1378, %v1498
  %v1500 = vpop.f32.mrb[0].mxu0
  %1501 = vmatprep.mubr.f32.mxu0 0.0
  %v1502 = vand.u32 %v1294, 4294901760
  %1503 = vmatmul.mubr.f32.gmra.mrb[0].mxu0 %v1502
  %v1504 = vpop.f32.mrb[0].mxu0
  %v1505 = vadd.f32 %v1388, %v1504
  %v1506 = vpop.f32.mrb[0].mxu0
  %1507 = vmatprep.mubr.f32.mxu0 0.0
  %v1508 = vand.u32 %v1297, 4294901760
  %1509 = vmatmul.mubr.f32.gmra.mrb[0].mxu0 %v1508
  %v1510 = vpop.f32.mrb[0].mxu0
  %v1511 = vadd.f32 %v1398, %v1510
  %v1512 = vpop.f32.mrb[0].mxu0
  %1513 = vmatprep.mubr.f32.mxu0 0.0
  %v1514 = vand.u32 %v1300, 4294901760
  %1515 = vmatmul.mubr.f32.gmra.mrb[0].mxu0 %v1514
  %v1516 = vpop.f32.mrb[0].mxu0
  %v1517 = vadd.f32 %v1408, %v1516
  %v1518 = vpop.f32.mrb[0].mxu0
  %1519 = vdwg.mxu0
  %1520 = vmatprep.subr.mxu0 0.0
  %v1521 = vand.u32 %v1257, 4294901760
  %v1522 = vsub.f32 %v1257, %v1521
  %1523 = vmatpush1.msra.mxu0 %v1522
  %1524 = vmatprep.subr.mxu0 0.0
  %v1525 = vand.u32 %v1258, 4294901760
  %v1526 = vsub.f32 %v1258, %v1525
  %1527 = vmatpush1.msra.mxu0 %v1526
  %1528 = vmatprep.subr.mxu0 0.0
  %v1529 = vand.u32 %v1259, 4294901760
  %v1530 = vsub.f32 %v1259, %v1529
  %1531 = vmatpush1.msra.mxu0 %v1530
  %1532 = vmatprep.subr.mxu0 0.0
  %v1533 = vand.u32 %v1260, 4294901760
  %v1534 = vsub.f32 %v1260, %v1533
  %1535 = vmatpush1.msra.mxu0 %v1534
  %1536 = vmatprep.subr.mxu0 0.0
  %1537 = vmatpush1.msra.mxu0 0.0
  %1538 = vmatprep.subr.mxu0 0.0
  %1539 = vmatpush1.msra.mxu0 0.0
  %1540 = vmatprep.subr.mxu0 0.0
  %1541 = vmatpush1.msra.mxu0 0.0
  %1542 = vmatprep.subr.mxu0 0.0
  %1543 = vmatpush1.msra.mxu0 0.0
  %1544 = vmatprep.subr.mxu0 0.0
  %1545 = vmatpush1.msra.mxu0 0.0
  %1546 = vmatprep.subr.mxu0 0.0
  %1547 = vmatpush1.msra.mxu0 0.0
  %1548 = vmatprep.subr.mxu0 0.0
  %1549 = vmatpush1.msra.mxu0 0.0
  %1550 = vmatprep.subr.mxu0 0.0
  %1551 = vmatpush1.msra.mxu0 0.0
  %1552 = vmatprep.subr.mxu0 0.0
  %1553 = vmatpush1.msra.mxu0 0.0
  %1554 = vmatprep.subr.mxu0 0.0
  %1555 = vmatpush1.msra.mxu0 0.0
  %1556 = vmatprep.subr.mxu0 0.0
  %1557 = vmatpush1.msra.mxu0 0.0
  %1558 = vmatprep.subr.mxu0 0.0
  %1559 = vmatpush1.msra.mxu0 0.0
  %1560 = vmatprep.subr.mxu0 0.0
  %1561 = vmatpush1.msra.mxu0 0.0
  %1562 = vmatprep.subr.mxu0 0.0
  %1563 = vmatpush1.msra.mxu0 0.0
  %1564 = vmatprep.subr.mxu0 0.0
  %1565 = vmatpush1.msra.mxu0 0.0
  %1566 = vmatprep.subr.mxu0 0.0
  %1567 = vmatpush1.msra.mxu0 0.0
  %1568 = vmatprep.subr.mxu0 0.0
  %1569 = vmatpush1.msra.mxu0 0.0
  %1570 = vmatprep.subr.mxu0 0.0
  %1571 = vmatpush1.msra.mxu0 0.0
  %1572 = vmatprep.subr.mxu0 0.0
  %1573 = vmatpush1.msra.mxu0 0.0
  %1574 = vmatprep.subr.mxu0 0.0
  %1575 = vmatpush1.msra.mxu0 0.0
  %1576 = vmatprep.subr.mxu0 0.0
  %1577 = vmatpush1.msra.mxu0 0.0
  %1578 = vmatprep.subr.mxu0 0.0
  %1579 = vmatpush1.msra.mxu0 0.0
  %1580 = vmatprep.subr.mxu0 0.0
  %1581 = vmatpush1.msra.mxu0 0.0
  %1582 = vmatprep.subr.mxu0 0.0
  %1583 = vmatpush1.msra.mxu0 0.0
  %1584 = vmatprep.subr.mxu0 0.0
  %1585 = vmatpush1.msra.mxu0 0.0
  %1586 = vmatprep.subr.mxu0 0.0
  %1587 = vmatpush1.msra.mxu0 0.0
  %1588 = vmatprep.subr.mxu0 0.0
  %1589 = vmatpush1.msra.mxu0 0.0
  %1590 = vmatprep.subr.mxu0 0.0
  %1591 = vmatpush1.msra.mxu0 0.0
  %1592 = vmatprep.mubr.f32.mxu0 0.0
  %v1593 = vand.u32 %v1291, 4294901760
  %v1594 = vsub.f32 %v1291, %v1593
  %1595 = vmatmul.mubr.f32.gmra.mrb[0].mxu0 %v1594
  %v1596 = vpop.f32.mrb[0].mxu0
  %v1597 = vadd.f32 %v1499, %v1596
  %v1598 = vpop.f32.mrb[0].mxu0
  %1599 = vmatprep.mubr.f32.mxu0 0.0
  %v1600 = vand.u32 %v1294, 4294901760
  %v1601 = vsub.f32 %v1294, %v1600
  %1602 = vmatmul.mubr.f32.gmra.mrb[0].mxu0 %v1601
  %v1603 = vpop.f32.mrb[0].mxu0
  %v1604 = vadd.f32 %v1505, %v1603
  %v1605 = vpop.f32.mrb[0].mxu0
  %1606 = vmatprep.mubr.f32.mxu0 0.0
  %v1607 = vand.u32 %v1297, 4294901760
  %v1608 = vsub.f32 %v1297, %v1607
  %1609 = vmatmul.mubr.f32.gmra.mrb[0].mxu0 %v1608
  %v1610 = vpop.f32.mrb[0].mxu0
  %v1611 = vadd.f32 %v1511, %v1610
  %v1612 = vpop.f32.mrb[0].mxu0
  %1613 = vmatprep.mubr.f32.mxu0 0.0
  %v1614 = vand.u32 %v1300, 4294901760
  %v1615 = vsub.f32 %v1300, %v1614
  %1616 = vmatmul.mubr.f32.gmra.mrb[0].mxu0 %v1615
  %v1617 = vpop.f32.mrb[0].mxu0
  %v1618 = vadd.f32 %v1517, %v1617
  %v1619 = vpop.f32.mrb[0].mxu0
  %1620 = vdwg.mxu0
  %1621 = vmatprep.subr.mxu0 0.0
  %v1622 = vand.u32 %v1257, 4294901760
  %1623 = vmatpush1.msra.mxu0 %v1622
  %1624 = vmatprep.subr.mxu0 0.0
  %v1625 = vand.u32 %v1258, 4294901760
  %1626 = vmatpush1.msra.mxu0 %v1625
  %1627 = vmatprep.subr.mxu0 0.0
  %v1628 = vand.u32 %v1259, 4294901760
  %1629 = vmatpush1.msra.mxu0 %v1628
  %1630 = vmatprep.subr.mxu0 0.0
  %v1631 = vand.u32 %v1260, 4294901760
  %1632 = vmatpush1.msra.mxu0 %v1631
  %1633 = vmatprep.subr.mxu0 0.0
  %1634 = vmatpush1.msra.mxu0 0.0
  %1635 = vmatprep.subr.mxu0 0.0
  %1636 = vmatpush1.msra.mxu0 0.0
  %1637 = vmatprep.subr.mxu0 0.0
  %1638 = vmatpush1.msra.mxu0 0.0
  %1639 = vmatprep.subr.mxu0 0.0
  %1640 = vmatpush1.msra.mxu0 0.0
  %1641 = vmatprep.subr.mxu0 0.0
  %1642 = vmatpush1.msra.mxu0 0.0
  %1643 = vmatprep.subr.mxu0 0.0
  %1644 = vmatpush1.msra.mxu0 0.0
  %1645 = vmatprep.subr.mxu0 0.0
  %1646 = vmatpush1.msra.mxu0 0.0
  %1647 = vmatprep.subr.mxu0 0.0
  %1648 = vmatpush1.msra.mxu0 0.0
  %1649 = vmatprep.subr.mxu0 0.0
  %1650 = vmatpush1.msra.mxu0 0.0
  %1651 = vmatprep.subr.mxu0 0.0
  %1652 = vmatpush1.msra.mxu0 0.0
  %1653 = vmatprep.subr.mxu0 0.0
  %1654 = vmatpush1.msra.mxu0 0.0
  %1655 = vmatprep.subr.mxu0 0.0
  %1656 = vmatpush1.msra.mxu0 0.0
  %1657 = vmatprep.subr.mxu0 0.0
  %1658 = vmatpush1.msra.mxu0 0.0
  %1659 = vmatprep.subr.mxu0 0.0
  %1660 = vmatpush1.msra.mxu0 0.0
  %1661 = vmatprep.subr.mxu0 0.0
  %1662 = vmatpush1.msra.mxu0 0.0
  %1663 = vmatprep.subr.mxu0 0.0
  %1664 = vmatpush1.msra.mxu0 0.0
  %1665 = vmatprep.subr.mxu0 0.0
  %1666 = vmatpush1.msra.mxu0 0.0
  %1667 = vmatprep.subr.mxu0 0.0
  %1668 = vmatpush1.msra.mxu0 0.0
  %1669 = vmatprep.subr.mxu0 0.0
  %1670 = vmatpush1.msra.mxu0 0.0
  %1671 = vmatprep.subr.mxu0 0.0
  %1672 = vmatpush1.msra.mxu0 0.0
  %1673 = vmatprep.subr.mxu0 0.0
  %1674 = vmatpush1.msra.mxu0 0.0
  %1675 = vmatprep.subr.mxu0 0.0
  %1676 = vmatpush1.msra.mxu0 0.0
  %1677 = vmatprep.subr.mxu0 0.0
  %1678 = vmatpush1.msra.mxu0 0.0
  %1679 = vmatprep.subr.mxu0 0.0
  %1680 = vmatpush1.msra.mxu0 0.0
  %1681 = vmatprep.subr.mxu0 0.0
  %1682 = vmatpush1.msra.mxu0 0.0
  %1683 = vmatprep.subr.mxu0 0.0
  %1684 = vmatpush1.msra.mxu0 0.0
  %1685 = vmatprep.subr.mxu0 0.0
  %1686 = vmatpush1.msra.mxu0 0.0
  %1687 = vmatprep.subr.mxu0 0.0
  %1688 = vmatpush1.msra.mxu0 0.0
  %1689 = vmatprep.mubr.f32.mxu0 0.0
  %v1690 = vand.u32 %v1291, 4294901760
  %v1691 = vsub.f32 %v1291, %v1690
  %v1692 = vand.u32 %v1691, 4294901760
  %1693 = vmatmul.mubr.f32.gmra.mrb[0].mxu0 %v1692
  %v1694 = vpop.f32.mrb[0].mxu0
  %v1695 = vadd.f32 %v1597, %v1694
  %v1696 = vpop.f32.mrb[0].mxu0
  %1697 = vmatprep.mubr.f32.mxu0 0.0
  %v1698 = vand.u32 %v1294, 4294901760
  %v1699 = vsub.f32 %v1294, %v1698
  %v1700 = vand.u32 %v1699, 4294901760
  %1701 = vmatmul.mubr.f32.gmra.mrb[0].mxu0 %v1700
  %v1702 = vpop.f32.mrb[0].mxu0
  %v1703 = vadd.f32 %v1604, %v1702
  %v1704 = vpop.f32.mrb[0].mxu0
  %1705 = vmatprep.mubr.f32.mxu0 0.0
  %v1706 = vand.u32 %v1297, 4294901760
  %v1707 = vsub.f32 %v1297, %v1706
  %v1708 = vand.u32 %v1707, 4294901760
  %1709 = vmatmul.mubr.f32.gmra.mrb[0].mxu0 %v1708
  %v1710 = vpop.f32.mrb[0].mxu0
  %v1711 = vadd.f32 %v1611, %v1710
  %v1712 = vpop.f32.mrb[0].mxu0
  %1713 = vmatprep.mubr.f32.mxu0 0.0
  %v1714 = vand.u32 %v1300, 4294901760
  %v1715 = vsub.f32 %v1300, %v1714
  %v1716 = vand.u32 %v1715, 4294901760
  %1717 = vmatmul.mubr.f32.gmra.mrb[0].mxu0 %v1716
  %v1718 = vpop.f32.mrb[0].mxu0
  %v1719 = vadd.f32 %v1618, %v1718
  %v1720 = vpop.f32.mrb[0].mxu0
  %1721 = vdwg.mxu0
  %1722 = vmatprep.subr.mxu0 0.0
  %v1723 = vand.u32 %v1257, 4294901760
  %v1724 = vsub.f32 %v1257, %v1723
  %v1725 = vand.u32 %v1724, 4294901760
  %1726 = vmatpush1.msra.mxu0 %v1725
  %1727 = vmatprep.subr.mxu0 0.0
  %v1728 = vand.u32 %v1258, 4294901760
  %v1729 = vsub.f32 %v1258, %v1728
  %v1730 = vand.u32 %v1729, 4294901760
  %1731 = vmatpush1.msra.mxu0 %v1730
  %1732 = vmatprep.subr.mxu0 0.0
  %v1733 = vand.u32 %v1259, 4294901760
  %v1734 = vsub.f32 %v1259, %v1733
  %v1735 = vand.u32 %v1734, 4294901760
  %1736 = vmatpush1.msra.mxu0 %v1735
  %1737 = vmatprep.subr.mxu0 0.0
  %v1738 = vand.u32 %v1260, 4294901760
  %v1739 = vsub.f32 %v1260, %v1738
  %v1740 = vand.u32 %v1739, 4294901760
  %1741 = vmatpush1.msra.mxu0 %v1740
  %1742 = vmatprep.subr.mxu0 0.0
  %1743 = vmatpush1.msra.mxu0 0.0
  %1744 = vmatprep.subr.mxu0 0.0
  %1745 = vmatpush1.msra.mxu0 0.0
  %1746 = vmatprep.subr.mxu0 0.0
  %1747 = vmatpush1.msra.mxu0 0.0
  %1748 = vmatprep.subr.mxu0 0.0
  %1749 = vmatpush1.msra.mxu0 0.0
  %1750 = vmatprep.subr.mxu0 0.0
  %1751 = vmatpush1.msra.mxu0 0.0
  %1752 = vmatprep.subr.mxu0 0.0
  %1753 = vmatpush1.msra.mxu0 0.0
  %1754 = vmatprep.subr.mxu0 0.0
  %1755 = vmatpush1.msra.mxu0 0.0
  %1756 = vmatprep.subr.mxu0 0.0
  %1757 = vmatpush1.msra.mxu0 0.0
  %1758 = vmatprep.subr.mxu0 0.0
  %1759 = vmatpush1.msra.mxu0 0.0
  %1760 = vmatprep.subr.mxu0 0.0
  %1761 = vmatpush1.msra.mxu0 0.0
  %1762 = vmatprep.subr.mxu0 0.0
  %1763 = vmatpush1.msra.mxu0 0.0
  %1764 = vmatprep.subr.mxu0 0.0
  %1765 = vmatpush1.msra.mxu0 0.0
  %1766 = vmatprep.subr.mxu0 0.0
  %1767 = vmatpush1.msra.mxu0 0.0
  %1768 = vmatprep.subr.mxu0 0.0
  %1769 = vmatpush1.msra.mxu0 0.0
  %1770 = vmatprep.subr.mxu0 0.0
  %1771 = vmatpush1.msra.mxu0 0.0
  %1772 = vmatprep.subr.mxu0 0.0
  %1773 = vmatpush1.msra.mxu0 0.0
  %1774 = vmatprep.subr.mxu0 0.0
  %1775 = vmatpush1.msra.mxu0 0.0
  %1776 = vmatprep.subr.mxu0 0.0
  %1777 = vmatpush1.msra.mxu0 0.0
  %1778 = vmatprep.subr.mxu0 0.0
  %1779 = vmatpush1.msra.mxu0 0.0
  %1780 = vmatprep.subr.mxu0 0.0
  %1781 = vmatpush1.msra.mxu0 0.0
  %1782 = vmatprep.subr.mxu0 0.0
  %1783 = vmatpush1.msra.mxu0 0.0
  %1784 = vmatprep.subr.mxu0 0.0
  %1785 = vmatpush1.msra.mxu0 0.0
  %1786 = vmatprep.subr.mxu0 0.0
  %1787 = vmatpush1.msra.mxu0 0.0
  %1788 = vmatprep.subr.mxu0 0.0
  %1789 = vmatpush1.msra.mxu0 0.0
  %1790 = vmatprep.subr.mxu0 0.0
  %1791 = vmatpush1.msra.mxu0 0.0
  %1792 = vmatprep.subr.mxu0 0.0
  %1793 = vmatpush1.msra.mxu0 0.0
  %1794 = vmatprep.subr.mxu0 0.0
  %1795 = vmatpush1.msra.mxu0 0.0
  %1796 = vmatprep.subr.mxu0 0.0
  %1797 = vmatpush1.msra.mxu0 0.0
  %1798 = vmatprep.mubr.f32.mxu0 0.0
  %v1799 = vand.u32 %v1291, 4294901760
  %1800 = vmatmul.mubr.f32.gmra.mrb[0].mxu0 %v1799
  %v1801 = vpop.f32.mrb[0].mxu0
  %v1802 = vadd.f32 %v1695, %v1801
  %v1803 = vpop.f32.mrb[0].mxu0
  %1804 = vmatprep.mubr.f32.mxu0 0.0
  %v1805 = vand.u32 %v1294, 4294901760
  %1806 = vmatmul.mubr.f32.gmra.mrb[0].mxu0 %v1805
  %v1807 = vpop.f32.mrb[0].mxu0
  %v1808 = vadd.f32 %v1703, %v1807
  %v1809 = vpop.f32.mrb[0].mxu0
  %1810 = vmatprep.mubr.f32.mxu0 0.0
  %v1811 = vand.u32 %v1297, 4294901760
  %1812 = vmatmul.mubr.f32.gmra.mrb[0].mxu0 %v1811
  %v1813 = vpop.f32.mrb[0].mxu0
  %v1814 = vadd.f32 %v1711, %v1813
  %v1815 = vpop.f32.mrb[0].mxu0
  %1816 = vmatprep.mubr.f32.mxu0 0.0
  %v1817 = vand.u32 %v1300, 4294901760
  %1818 = vmatmul.mubr.f32.gmra.mrb[0].mxu0 %v1817
  %v1819 = vpop.f32.mrb[0].mxu0
  %v1820 = vadd.f32 %v1719, %v1819
  %v1821 = vpop.f32.mrb[0].mxu0
  %1822 = vdwg.mxu0
  %1823 = vmatprep.subr.mxu0 0.0
  %v1824 = vand.u32 %v1257, 4294901760
  %1825 = vmatpush1.msra.mxu0 %v1824
  %1826 = vmatprep.subr.mxu0 0.0
  %v1827 = vand.u32 %v1258, 4294901760
  %1828 = vmatpush1.msra.mxu0 %v1827
  %1829 = vmatprep.subr.mxu0 0.0
  %v1830 = vand.u32 %v1259, 4294901760
  %1831 = vmatpush1.msra.mxu0 %v1830
  %1832 = vmatprep.subr.mxu0 0.0
  %v1833 = vand.u32 %v1260, 4294901760
  %1834 = vmatpush1.msra.mxu0 %v1833
  %1835 = vmatprep.subr.mxu0 0.0
  %1836 = vmatpush1.msra.mxu0 0.0
  %1837 = vmatprep.subr.mxu0 0.0
  %1838 = vmatpush1.msra.mxu0 0.0
  %1839 = vmatprep.subr.mxu0 0.0
  %1840 = vmatpush1.msra.mxu0 0.0
  %1841 = vmatprep.subr.mxu0 0.0
  %1842 = vmatpush1.msra.mxu0 0.0
  %1843 = vmatprep.subr.mxu0 0.0
  %1844 = vmatpush1.msra.mxu0 0.0
  %1845 = vmatprep.subr.mxu0 0.0
  %1846 = vmatpush1.msra.mxu0 0.0
  %1847 = vmatprep.subr.mxu0 0.0
  %1848 = vmatpush1.msra.mxu0 0.0
  %1849 = vmatprep.subr.mxu0 0.0
  %1850 = vmatpush1.msra.mxu0 0.0
  %1851 = vmatprep.subr.mxu0 0.0
  %1852 = vmatpush1.msra.mxu0 0.0
  %1853 = vmatprep.subr.mxu0 0.0
  %1854 = vmatpush1.msra.mxu0 0.0
  %1855 = vmatprep.subr.mxu0 0.0
  %1856 = vmatpush1.msra.mxu0 0.0
  %1857 = vmatprep.subr.mxu0 0.0
  %1858 = vmatpush1.msra.mxu0 0.0
  %1859 = vmatprep.subr.mxu0 0.0
  %1860 = vmatpush1.msra.mxu0 0.0
  %1861 = vmatprep.subr.mxu0 0.0
  %1862 = vmatpush1.msra.mxu0 0.0
  %1863 = vmatprep.subr.mxu0 0.0
  %1864 = vmatpush1.msra.mxu0 0.0
  %1865 = vmatprep.subr.mxu0 0.0
  %1866 = vmatpush1.msra.mxu0 0.0
  %1867 = vmatprep.subr.mxu0 0.0
  %1868 = vmatpush1.msra.mxu0 0.0
  %1869 = vmatprep.subr.mxu0 0.0
  %1870 = vmatpush1.msra.mxu0 0.0
  %1871 = vmatprep.subr.mxu0 0.0
  %1872 = vmatpush1.msra.mxu0 0.0
  %1873 = vmatprep.subr.mxu0 0.0
  %1874 = vmatpush1.msra.mxu0 0.0
  %1875 = vmatprep.subr.mxu0 0.0
  %1876 = vmatpush1.msra.mxu0 0.0
  %1877 = vmatprep.subr.mxu0 0.0
  %1878 = vmatpush1.msra.mxu0 0.0
  %1879 = vmatprep.subr.mxu0 0.0
  %1880 = vmatpush1.msra.mxu0 0.0
  %1881 = vmatprep.subr.mxu0 0.0
  %1882 = vmatpush1.msra.mxu0 0.0
  %1883 = vmatprep.subr.mxu0 0.0
  %1884 = vmatpush1.msra.mxu0 0.0
  %1885 = vmatprep.subr.mxu0 0.0
  %1886 = vmatpush1.msra.mxu0 0.0
  %1887 = vmatprep.subr.mxu0 0.0
  %1888 = vmatpush1.msra.mxu0 0.0
  %1889 = vmatprep.subr.mxu0 0.0
  %1890 = vmatpush1.msra.mxu0 0.0
  %1891 = vmatprep.mubr.f32.mxu0 0.0
  %v1892 = vand.u32 %v1291, 4294901760
  %1893 = vmatmul.mubr.f32.gmra.mrb[0].mxu0 %v1892
  %v1894 = vpop.f32.mrb[0].mxu0
  %v1895 = vadd.f32 %v1802, %v1894
  %v1896 = vpop.f32.mrb[0].mxu0
  %1897 = vmatprep.mubr.f32.mxu0 0.0
  %v1898 = vand.u32 %v1294, 4294901760
  %1899 = vmatmul.mubr.f32.gmra.mrb[0].mxu0 %v1898
  %v1900 = vpop.f32.mrb[0].mxu0
  %v1901 = vadd.f32 %v1808, %v1900
  %v1902 = vpop.f32.mrb[0].mxu0
  %1903 = vmatprep.mubr.f32.mxu0 0.0
  %v1904 = vand.u32 %v1297, 4294901760
  %1905 = vmatmul.mubr.f32.gmra.mrb[0].mxu0 %v1904
  %v1906 = vpop.f32.mrb[0].mxu0
  %v1907 = vadd.f32 %v1814, %v1906
  %v1908 = vpop.f32.mrb[0].mxu0
  %1909 = vmatprep.mubr.f32.mxu0 0.0
  %v1910 = vand.u32 %v1300, 4294901760
  %1911 = vmatmul.mubr.f32.gmra.mrb[0].mxu0 %v1910
  %v1912 = vpop.f32.mrb[0].mxu0
  %v1913 = vadd.f32 %v1820, %v1912
  %v1914 = vpop.f32.mrb[0].mxu0
  %1915 = vdwg.mxu0
  %v1916 = vmax.f32 %v1895, 0.0
  %v1917 = vmax.f32 %v1901, 0.0
  %v1918 = vmax.f32 %v1907, 0.0
  %v1919 = vmax.f32 %v1913, 0.0
  %v1920 = vmin.f32 %v1916, 6.0
  %v1921 = vmin.f32 %v1917, 6.0
  %v1922 = vmin.f32 %v1918, 6.0
  %v1923 = vmin.f32 %v1919, 6.0
  %v1924 = vld [vmem:[%s7] sm:$0xff]
  %v1925 = vld [vmem:[%s7 + $0x8] sm:$0xff]
  %v1926 = vld [vmem:[%s7 + $0x10] sm:$0xff]
  %v1927 = vld [vmem:[%s7 + $0x18] sm:$0xff]
  %1929 = vset.pattern.permute.xlu0 0
  %1930 = vperm.xlu0 %1929, %v1924
  %v1931 = vpop.permute.xlu0 %1930
  %1934 = vset.pattern.permute.xlu0 0
  %1935 = vperm.xlu0 %1934, %v1925
  %v1936 = vpop.permute.xlu0 %1935
  %1939 = vset.pattern.permute.xlu0 0
  %1940 = vperm.xlu0 %1939, %v1926
  %v1941 = vpop.permute.xlu0 %1940
  %1944 = vset.pattern.permute.xlu0 0
  %1945 = vperm.xlu0 %1944, %v1927
  %v1946 = vpop.permute.xlu0 %1945
  %v1948 = vmul.f32 %v1920, %v1931
  %v1949 = vmul.f32 %v1921, %v1936
  %v1950 = vmul.f32 %v1922, %v1941
  %v1951 = vmul.f32 %v1923, %v1946
  %v1952 = vadd.f32 %v1948, %v1949
  %v1953 = vadd.f32 %v1952, %v1950
  %v1954 = vadd.f32 %v1953, %v1951
  %v1955 = vrot.slane %v1954, 4
  %v1956 = vadd.f32 %v1954, %v1955
  %v1957 = vrot.slane %v1956, 2
  %v1958 = vadd.f32 %v1956, %v1957
  %v1959 = vrot.slane %v1958, 1
  %v1960 = vadd.f32 %v1958, %v1959
  %s1961 = sld [smem:[#allocation2]]
  %v1962 = vstv %s1961
  %v1963 = vadd.f32 %v1960, %v1962
  %1964 = vst [vmem:[%s9] sm:$0x1] %v1963
  // Predicated region
  $region38: #{mlp_forward.1} parent=0 // pred_check
    _
  $region39: #{mlp_forward.1} parent=0 // pred_check_branch
    %1966 = sbr.rel (0) target = $region41
  $region40: #{mlp_forward.1} parent=0 // pred_region
    _
  $region41: #{mlp_forward.1} parent=0 // pred_fallthru
    _
  // Predicated region
  $region42: #{mlp_forward.1} parent=0 // pred_check
    _
  $region43: #{mlp_forward.1} parent=0 // pred_check_branch
    %1968 = sbr.rel (0) target = $region45
  $region44: #{mlp_forward.1} parent=0 // pred_region
    _
  $region45: #{mlp_forward.1} parent=0 // pred_fallthru
    _

</llo_original>
